<compile_context>
chip_gen: v7x
topology: tpu7x:2x2x1
jax: 0.10.0
libtpu: 0.0.40
codegen_flags: <defaults>
</compile_context>

<pallas_src>
import jax
import jax.numpy as jnp
from jax.experimental import pallas as pl
from jax.experimental.pallas import tpu as pltpu

NEG_SLOPE = 0.2  # PyG GATConv default LeakyReLU negative slope


def _gat_fused_kernel(x_ref, w1_ref, as1_ref, ad1_ref, b1_ref,
                      w2_ref, as2_ref, ad2_ref, b2_ref,
                      maskt_ref, seld_ref, sums_ref, lanet_ref, reprow_ref, blkm_ref,
                      out_ref):
    """Full 2-layer GAT forward for all nodes in one invocation.

    x_ref      : (N, F)        node features (f32)
    w1_ref     : (F, H*C)      layer-1 weights, heads packed on lanes (bf16)
    as1_ref    : (H, H*C)      block-diagonal per-head a_src vectors (f32)
    ad1_ref    : (H, H*C)      block-diagonal per-head a_dst vectors (f32)
    b1_ref     : (1, H*C)      layer-1 bias, concat layout (f32)
    w2_ref     : (H*C, O)      layer-2 weights (bf16)
    as2_ref    : (1, O)        layer-2 a_src (f32)
    ad2_ref    : (1, O)        layer-2 a_dst (f32)
    b2_ref     : (1, O)        layer-2 bias (f32)
    maskt_ref  : (N, H*N)      additive mask bias tiled per head (bf16): 0 on edge, -1e9 else
    seld_ref   : (H, H*N)      selector: sel[h, h*N+j] = 1                       (f32)
    sums_ref   : (H*N, H)      selector transpose (per-head row-sum)             (f32)
    lanet_ref  : (N, H*N)      identity tiled along lanes: [j, h*N+j] = 1        (f32)
    reprow_ref : (H*N, N)      identity stacked along rows: [h*N+j, j] = 1       (f32)
    blkm_ref   : (H*N, H*C)    block mask: [h*N+j, h'*C+c] = (h == h')           (f32)
    out_ref    : (N, O)        log-softmax output (f32)
    """
    f32 = jnp.float32
    bf16 = jnp.bfloat16
    n = x_ref.shape[0]

    mask_all = maskt_ref[...].astype(f32)       # (N, H*N) additive bias
    sel_dst = seld_ref[...]                     # (H, H*N)
    sum_sel = sums_ref[...]                     # (H*N, H)
    lane_tile = lanet_ref[...]                  # (N, H*N)
    rep_rows = reprow_ref[...]                  # (H*N, N)
    blk_mask = blkm_ref[...]                    # (H*N, H*C)

    # ---------------- Layer 1: multi-head, concat=True, bias + ReLU ----------------
    xw1 = jnp.dot(x_ref[...].astype(bf16), w1_ref[...],
                  preferred_element_type=f32)                               # (N, H*C)

    # Per-head attention logits (block-diagonal attention vectors).
    a_dst = jax.lax.dot_general(xw1, ad1_ref[...], (((1,), (1,)), ((), ())),
                                preferred_element_type=f32)                 # (N, H)
    a_src = jax.lax.dot_general(as1_ref[...], xw1, (((1,), (1,)), ((), ())),
                                preferred_element_type=f32)                 # (H, N)

    # Lane-pack all heads: e_all[i, h*N+j] = a_dst[i,h] + a_src[h,j].
    dst_term = jnp.dot(a_dst, sel_dst, preferred_element_type=f32)          # (N, H*N)
    src_blocks = jnp.dot(a_src, lane_tile, preferred_element_type=f32)      # (H, H*N)
    src_flat = jnp.sum(src_blocks * sel_dst, axis=0, keepdims=True)         # (1, H*N)

    e = dst_term + src_flat                                                 # (N, H*N)
    e = jnp.maximum(e, NEG_SLOPE * e) + mask_all                            # LeakyReLU + mask

    # Softmax over incoming edges, all heads in one pass.  A single global row-max is
    # exact here because each head is normalized by its own denominator below.
    m = jnp.max(e, axis=1, keepdims=True)                                   # (N, 1)
    p = jnp.exp(e - m)                                                      # (N, H*N)
    denom = jnp.dot(p, sum_sel, preferred_element_type=f32)                 # (N, H) per-head sums
    recip = pl.reciprocal(denom, approx=True)                               # EUP
    p_norm = p * jnp.dot(recip, sel_dst, preferred_element_type=f32)        # (N, H*N)

    # Single block-diagonal aggregation matmul -> concat layout directly (no scratch).
    xw_rep = jnp.dot(rep_rows, xw1, preferred_element_type=f32)             # (H*N, H*C)
    bd = (xw_rep * blk_mask).astype(bf16)                                   # blockdiag(xw1)
    agg1 = jnp.dot(p_norm.astype(bf16), bd, preferred_element_type=f32)     # (N, H*C)
    h1 = jnp.maximum(agg1 + b1_ref[...], 0.0)                               # bias + ReLU

    # ---------------- Layer 2: single head, concat=False, bias + log_softmax -------
    xw2 = jnp.dot(h1.astype(bf16), w2_ref[...], preferred_element_type=f32)  # (N, O)
    a_dst2 = jax.lax.dot_general(xw2, ad2_ref[...], (((1,), (1,)), ((), ())),
                                 preferred_element_type=f32)                # (N, 1)
    a_src2 = jax.lax.dot_general(as2_ref[...], xw2, (((1,), (1,)), ((), ())),
                                 preferred_element_type=f32)                # (1, N)
    e2 = a_dst2 + a_src2                                                    # (N, N)
    e2 = jnp.maximum(e2, NEG_SLOPE * e2) + mask_all[:, :n]                  # head-0 block == mask
    m2 = jnp.max(e2, axis=1, keepdims=True)
    p2 = jnp.exp(e2 - m2)
    den2 = jnp.sum(p2, axis=1, keepdims=True)
    p2n = p2 * pl.reciprocal(den2, approx=True)
    h2 = jnp.dot(p2n.astype(bf16), xw2.astype(bf16),
                 preferred_element_type=f32) + b2_ref[...]                  # (N, O)

    # log_softmax over classes
    m3 = jnp.max(h2, axis=1, keepdims=True)
    s = h2 - m3
    out_ref[...] = s - jnp.log(jnp.sum(jnp.exp(s), axis=1, keepdims=True))


def init_gat_params(key, in_channels, hidden_channels, out_channels, heads):
    ks = jax.random.split(key, 8)
    s1 = 1.0 / jnp.sqrt(jnp.float32(in_channels))
    s2 = 1.0 / jnp.sqrt(jnp.float32(heads * hidden_channels))
    return {
        # conv1: `heads` parallel heads, concat=True
        "W1": jax.random.normal(ks[0], (heads, in_channels, hidden_channels), jnp.float32) * s1,
        "as1": jax.random.normal(ks[1], (heads, 1, hidden_channels), jnp.float32) * s1,
        "ad1": jax.random.normal(ks[2], (heads, 1, hidden_channels), jnp.float32) * s1,
        "b1": jnp.zeros((heads, 1, hidden_channels), jnp.float32),
        # conv2: single head, concat=False
        "W2": jax.random.normal(ks[3], (1, heads * hidden_channels, out_channels), jnp.float32) * s2,
        "as2": jax.random.normal(ks[4], (1, 1, out_channels), jnp.float32) * s2,
        "ad2": jax.random.normal(ks[5], (1, 1, out_channels), jnp.float32) * s2,
        "b2": jnp.zeros((1, 1, out_channels), jnp.float32),
    }


def gat_forward(params, x, edge_index, *, heads):
    N, F = x.shape
    H = heads
    hidden = params["W1"].shape[-1]
    out_channels = params["W2"].shape[-1]
    HC = H * hidden
    HN = H * N

    # Dense adjacency mask[dst, src] with self-loops (PyG add_self_loops=True), as an
    # additive softmax bias (0 on edges, -1e9 elsewhere), tiled once per head (bf16).
    adj = jnp.zeros((N, N), jnp.float32).at[edge_index[1], edge_index[0]].set(1.0)
    adj = jnp.maximum(adj, jnp.eye(N, dtype=jnp.float32))
    mask_bias = (adj - 1.0) * 1e9
    mask_tiled = jnp.tile(mask_bias, (1, H)).astype(jnp.bfloat16)           # (N, H*N)

    # Pack heads onto the lane axis: W_all[f, h*C + c] = W1[h, f, c]  (bf16 for MXU).
    w1_all = jnp.transpose(params["W1"], (1, 0, 2)).reshape(F, HC).astype(jnp.bfloat16)
    b1_all = params["b1"].reshape(1, HC)
    # Block-diagonal attention vectors: bd[h, g*C + c] = a[h, c] if g == h else 0.
    eye_h = jnp.eye(H, dtype=jnp.float32)
    as1_bd = jnp.einsum("hc,hg->hgc", params["as1"][:, 0, :], eye_h).reshape(H, HC)
    ad1_bd = jnp.einsum("hc,hg->hgc", params["ad1"][:, 0, :], eye_h).reshape(H, HC)

    w2 = params["W2"][0].astype(jnp.bfloat16)   # (H*C, O)
    as2 = params["as2"][0]                      # (1, O)
    ad2 = params["ad2"][0]                      # (1, O)
    b2 = params["b2"][0]                        # (1, O)

    # Constant head<->lane-block selector matrices (keep all relayouts on the MXU).
    head_of_col = jnp.arange(HN, dtype=jnp.int32) // N                      # (HN,)
    head_of_out = jnp.arange(HC, dtype=jnp.int32) // hidden                 # (HC,)
    sel_dst = (jnp.arange(H, dtype=jnp.int32)[:, None]
               == head_of_col[None, :]).astype(jnp.float32)                 # (H, HN)
    sum_sel = sel_dst.T                                                     # (HN, H)
    lane_tile = jnp.tile(jnp.eye(N, dtype=jnp.float32), (1, H))             # (N, HN)
    rep_rows = lane_tile.T                                                  # (HN, N)
    blk_mask = (head_of_col[:, None]
                == head_of_out[None, :]).astype(jnp.float32)                # (HN, HC)

    full = lambda shape: pl.BlockSpec(shape, lambda i: (0, 0))
    return pl.pallas_call(
        _gat_fused_kernel,
        out_shape=jax.ShapeDtypeStruct((N, out_channels), jnp.float32),
        grid_spec=pltpu.PrefetchScalarGridSpec(
            num_scalar_prefetch=0,
            grid=(1,),
            in_specs=[
                full((N, F)),                   # x
                full((F, HC)),                  # W1 (heads fused, bf16)
                full((H, HC)),                  # a_src block-diag
                full((H, HC)),                  # a_dst block-diag
                full((1, HC)),                  # bias 1
                full((HC, out_channels)),       # W2 (bf16)
                full((1, out_channels)),        # a_src 2
                full((1, out_channels)),        # a_dst 2
                full((1, out_channels)),        # bias 2
                full((N, HN)),                  # additive mask bias, tiled per head (bf16)
                full((H, HN)),                  # sel_dst
                full((HN, H)),                  # sum_sel
                full((N, HN)),                  # lane_tile
                full((HN, N)),                  # rep_rows
                full((HN, HC)),                 # blk_mask
            ],
            out_specs=pl.BlockSpec((N, out_channels), lambda i: (0, 0)),
        ),
        compiler_params=pltpu.CompilerParams(dimension_semantics=("arbitrary",)),
    )(x, w1_all, as1_bd, ad1_bd, b1_all, w2, as2, ad2, b2,
      mask_tiled, sel_dst, sum_sel, lane_tile, rep_rows, blk_mask)


if __name__ == "__main__":
    key = jax.random.PRNGKey(0)
    k_x, k_e, k_p = jax.random.split(key, 3)

    N = 16              # number of graph nodes
    E = 40              # number of edges
    in_channels = 16
    hidden_channels = 8
    out_channels = 4
    heads = 8

    x = jax.random.normal(k_x, (N, in_channels), jnp.float32)
    edge_index = jax.random.randint(k_e, (2, E), 0, N, jnp.int32)

    params = init_gat_params(k_p, in_channels, hidden_channels, out_channels, heads)

    out = gat_forward(params, x, edge_index, heads=heads)
    out = jax.block_until_ready(out)
    assert out.shape == (N, out_channels)
    print("KERNEL_OK")
</pallas_src>

<mosaic_0001>
module attributes {stable_mosaic.version = 11 : i64} {
  func.func @_gat_fused_kernel(%arg0: i32, %arg1: memref<16x16xf32, #tpu.memory_space<vmem>>, %arg2: memref<16x64xbf16, #tpu.memory_space<vmem>>, %arg3: memref<8x64xf32, #tpu.memory_space<vmem>>, %arg4: memref<8x64xf32, #tpu.memory_space<vmem>>, %arg5: memref<1x64xf32, #tpu.memory_space<vmem>>, %arg6: memref<64x4xbf16, #tpu.memory_space<vmem>>, %arg7: memref<1x4xf32, #tpu.memory_space<vmem>>, %arg8: memref<1x4xf32, #tpu.memory_space<vmem>>, %arg9: memref<1x4xf32, #tpu.memory_space<vmem>>, %arg10: memref<16x128xbf16, #tpu.memory_space<vmem>>, %arg11: memref<8x128xf32, #tpu.memory_space<vmem>>, %arg12: memref<128x8xf32, #tpu.memory_space<vmem>>, %arg13: memref<16x128xf32, #tpu.memory_space<vmem>>, %arg14: memref<128x16xf32, #tpu.memory_space<vmem>>, %arg15: memref<128x64xf32, #tpu.memory_space<vmem>>, %arg16: memref<16x4xf32, #tpu.memory_space<vmem>>) attributes {dimension_semantics = [#tpu.dimension_semantics<arbitrary>], iteration_bounds = array<i64: 1>, scalar_prefetch = 0 : i64, scratch_operands = 0 : i64, tpu.core_type = #tpu.core_type<tc>, window_params = [{pipeline_mode = #tpu.pipeline_mode<synchronous>, transform_indices = @transform_0, window_bounds = array<i64: 16, 16>}, {pipeline_mode = #tpu.pipeline_mode<synchronous>, transform_indices = @transform_1, window_bounds = array<i64: 16, 64>}, {pipeline_mode = #tpu.pipeline_mode<synchronous>, transform_indices = @transform_2, window_bounds = array<i64: 8, 64>}, {pipeline_mode = #tpu.pipeline_mode<synchronous>, transform_indices = @transform_3, window_bounds = array<i64: 8, 64>}, {pipeline_mode = #tpu.pipeline_mode<synchronous>, transform_indices = @transform_4, window_bounds = array<i64: 1, 64>}, {pipeline_mode = #tpu.pipeline_mode<synchronous>, transform_indices = @transform_5, window_bounds = array<i64: 64, 4>}, {pipeline_mode = #tpu.pipeline_mode<synchronous>, transform_indices = @transform_6, window_bounds = array<i64: 1, 4>}, {pipeline_mode = #tpu.pipeline_mode<synchronous>, transform_indices = @transform_7, window_bounds = array<i64: 1, 4>}, {pipeline_mode = #tpu.pipeline_mode<synchronous>, transform_indices = @transform_8, window_bounds = array<i64: 1, 4>}, {pipeline_mode = #tpu.pipeline_mode<synchronous>, transform_indices = @transform_9, window_bounds = array<i64: 16, 128>}, {pipeline_mode = #tpu.pipeline_mode<synchronous>, transform_indices = @transform_10, window_bounds = array<i64: 8, 128>}, {pipeline_mode = #tpu.pipeline_mode<synchronous>, transform_indices = @transform_11, window_bounds = array<i64: 128, 8>}, {pipeline_mode = #tpu.pipeline_mode<synchronous>, transform_indices = @transform_12, window_bounds = array<i64: 16, 128>}, {pipeline_mode = #tpu.pipeline_mode<synchronous>, transform_indices = @transform_13, window_bounds = array<i64: 128, 16>}, {pipeline_mode = #tpu.pipeline_mode<synchronous>, transform_indices = @transform_14, window_bounds = array<i64: 128, 64>}, {pipeline_mode = #tpu.pipeline_mode<synchronous>, transform_indices = @transform_15, window_bounds = array<i64: 16, 4>}]} {
    %c0 = arith.constant 0 : index
    %c0_0 = arith.constant 0 : index
    %0 = vector.load %arg10[%c0, %c0_0] : memref<16x128xbf16, #tpu.memory_space<vmem>>, vector<16x128xbf16>
    %1 = arith.extf %0 : vector<16x128xbf16> to vector<16x128xf32>
    %c0_1 = arith.constant 0 : index
    %c0_2 = arith.constant 0 : index
    %2 = vector.load %arg11[%c0_1, %c0_2] : memref<8x128xf32, #tpu.memory_space<vmem>>, vector<8x128xf32>
    %c0_3 = arith.constant 0 : index
    %c0_4 = arith.constant 0 : index
    %3 = vector.load %arg12[%c0_3, %c0_4] : memref<128x8xf32, #tpu.memory_space<vmem>>, vector<128x8xf32>
    %c0_5 = arith.constant 0 : index
    %c0_6 = arith.constant 0 : index
    %4 = vector.load %arg13[%c0_5, %c0_6] : memref<16x128xf32, #tpu.memory_space<vmem>>, vector<16x128xf32>
    %c0_7 = arith.constant 0 : index
    %c0_8 = arith.constant 0 : index
    %5 = vector.load %arg14[%c0_7, %c0_8] : memref<128x16xf32, #tpu.memory_space<vmem>>, vector<128x16xf32>
    %c0_9 = arith.constant 0 : index
    %c0_10 = arith.constant 0 : index
    %6 = vector.load %arg15[%c0_9, %c0_10] : memref<128x64xf32, #tpu.memory_space<vmem>>, vector<128x64xf32>
    %c0_11 = arith.constant 0 : index
    %c0_12 = arith.constant 0 : index
    %7 = vector.load %arg1[%c0_11, %c0_12] : memref<16x16xf32, #tpu.memory_space<vmem>>, vector<16x16xf32>
    %8 = arith.truncf %7 : vector<16x16xf32> to vector<16x16xbf16>
    %c0_13 = arith.constant 0 : index
    %c0_14 = arith.constant 0 : index
    %9 = vector.load %arg2[%c0_13, %c0_14] : memref<16x64xbf16, #tpu.memory_space<vmem>>, vector<16x64xbf16>
    %cst = arith.constant dense<0.000000e+00> : vector<16x64xf32>
    %10 = tpu.matmul %8, %9, %cst {dimension_numbers = #tpu.dot_dimension_numbers<[1], [0], [0], [1], [0, 0, 1, 1], [], []>} : vector<16x16xbf16>, vector<16x64xbf16>, vector<16x64xf32> -> vector<16x64xf32>
    %c0_15 = arith.constant 0 : index
    %c0_16 = arith.constant 0 : index
    %11 = vector.load %arg4[%c0_15, %c0_16] : memref<8x64xf32, #tpu.memory_space<vmem>>, vector<8x64xf32>
    %cst_17 = arith.constant dense<0.000000e+00> : vector<16x8xf32>
    %12 = tpu.matmul %10, %11, %cst_17 {dimension_numbers = #tpu.dot_dimension_numbers<[1], [1], [0], [0], [0, 0, 1, 0], [], []>} : vector<16x64xf32>, vector<8x64xf32>, vector<16x8xf32> -> vector<16x8xf32>
    %c0_18 = arith.constant 0 : index
    %c0_19 = arith.constant 0 : index
    %13 = vector.load %arg3[%c0_18, %c0_19] : memref<8x64xf32, #tpu.memory_space<vmem>>, vector<8x64xf32>
    %cst_20 = arith.constant dense<0.000000e+00> : vector<8x16xf32>
    %14 = tpu.matmul %13, %10, %cst_20 {dimension_numbers = #tpu.dot_dimension_numbers<[1], [1], [0], [0], [0, 0, 1, 0], [], []>} : vector<8x64xf32>, vector<16x64xf32>, vector<8x16xf32> -> vector<8x16xf32>
    %cst_21 = arith.constant dense<0.000000e+00> : vector<16x128xf32>
    %15 = tpu.matmul %12, %2, %cst_21 {dimension_numbers = #tpu.dot_dimension_numbers<[1], [0], [0], [1], [0, 0, 1, 1], [], []>} : vector<16x8xf32>, vector<8x128xf32>, vector<16x128xf32> -> vector<16x128xf32>
    %cst_22 = arith.constant dense<0.000000e+00> : vector<8x128xf32>
    %16 = tpu.matmul %14, %4, %cst_22 {dimension_numbers = #tpu.dot_dimension_numbers<[1], [0], [0], [1], [0, 0, 1, 1], [], []>} : vector<8x16xf32>, vector<16x128xf32>, vector<8x128xf32> -> vector<8x128xf32>
    %17 = arith.mulf %16, %2 : vector<8x128xf32>
    %cst_23 = arith.constant dense<0.000000e+00> : vector<128xf32>
    %18 = vector.multi_reduction <add>, %17, %cst_23 [0] : vector<8x128xf32> to vector<128xf32>
    %19 = vector.shape_cast %18 : vector<128xf32> to vector<1x128xf32>
    %20 = vector.broadcast %19 : vector<1x128xf32> to vector<16x128xf32>
    %21 = arith.addf %15, %20 : vector<16x128xf32>
    %cst_24 = arith.constant 2.000000e-01 : f32
    %22 = vector.broadcast %cst_24 : f32 to vector<16x128xf32>
    %23 = arith.mulf %22, %21 : vector<16x128xf32>
    %24 = arith.maximumf %21, %23 : vector<16x128xf32>
    %25 = arith.addf %24, %1 : vector<16x128xf32>
    %cst_25 = arith.constant dense<0xFF800000> : vector<16xf32>
    %26 = vector.multi_reduction <maximumf>, %25, %cst_25 [1] : vector<16x128xf32> to vector<16xf32>
    %27 = vector.shape_cast %26 : vector<16xf32> to vector<16x1xf32>
    %28 = vector.broadcast %27 : vector<16x1xf32> to vector<16x128xf32>
    %29 = arith.subf %25, %28 : vector<16x128xf32>
    %30 = math.exp %29 : vector<16x128xf32>
    %cst_26 = arith.constant dense<0.000000e+00> : vector<16x8xf32>
    %31 = tpu.matmul %30, %3, %cst_26 {dimension_numbers = #tpu.dot_dimension_numbers<[1], [0], [0], [1], [0, 0, 1, 1], [], []>} : vector<16x128xf32>, vector<128x8xf32>, vector<16x8xf32> -> vector<16x8xf32>
    %32 = tpu.reciprocal %31 {approx = true} : vector<16x8xf32> -> vector<16x8xf32>
    %cst_27 = arith.constant dense<0.000000e+00> : vector<16x128xf32>
    %33 = tpu.matmul %32, %2, %cst_27 {dimension_numbers = #tpu.dot_dimension_numbers<[1], [0], [0], [1], [0, 0, 1, 1], [], []>} : vector<16x8xf32>, vector<8x128xf32>, vector<16x128xf32> -> vector<16x128xf32>
    %34 = arith.mulf %30, %33 : vector<16x128xf32>
    %cst_28 = arith.constant dense<0.000000e+00> : vector<128x64xf32>
    %35 = tpu.matmul %5, %10, %cst_28 {dimension_numbers = #tpu.dot_dimension_numbers<[1], [0], [0], [1], [0, 0, 1, 1], [], []>} : vector<128x16xf32>, vector<16x64xf32>, vector<128x64xf32> -> vector<128x64xf32>
    %36 = arith.mulf %35, %6 : vector<128x64xf32>
    %37 = arith.truncf %36 : vector<128x64xf32> to vector<128x64xbf16>
    %38 = arith.truncf %34 : vector<16x128xf32> to vector<16x128xbf16>
    %cst_29 = arith.constant dense<0.000000e+00> : vector<16x64xf32>
    %39 = tpu.matmul %38, %37, %cst_29 {dimension_numbers = #tpu.dot_dimension_numbers<[1], [0], [0], [1], [0, 0, 1, 1], [], []>} : vector<16x128xbf16>, vector<128x64xbf16>, vector<16x64xf32> -> vector<16x64xf32>
    %c0_30 = arith.constant 0 : index
    %c0_31 = arith.constant 0 : index
    %40 = vector.load %arg5[%c0_30, %c0_31] : memref<1x64xf32, #tpu.memory_space<vmem>>, vector<1x64xf32>
    %41 = vector.broadcast %40 : vector<1x64xf32> to vector<16x64xf32>
    %42 = arith.addf %39, %41 : vector<16x64xf32>
    %cst_32 = arith.constant 0.000000e+00 : f32
    %43 = vector.broadcast %cst_32 : f32 to vector<16x64xf32>
    %44 = arith.maximumf %42, %43 : vector<16x64xf32>
    %45 = arith.truncf %44 : vector<16x64xf32> to vector<16x64xbf16>
    %c0_33 = arith.constant 0 : index
    %c0_34 = arith.constant 0 : index
    %46 = vector.load %arg6[%c0_33, %c0_34] : memref<64x4xbf16, #tpu.memory_space<vmem>>, vector<64x4xbf16>
    %cst_35 = arith.constant dense<0.000000e+00> : vector<16x4xf32>
    %47 = tpu.matmul %45, %46, %cst_35 {dimension_numbers = #tpu.dot_dimension_numbers<[1], [0], [0], [1], [0, 0, 1, 1], [], []>} : vector<16x64xbf16>, vector<64x4xbf16>, vector<16x4xf32> -> vector<16x4xf32>
    %c0_36 = arith.constant 0 : index
    %c0_37 = arith.constant 0 : index
    %48 = vector.load %arg8[%c0_36, %c0_37] : memref<1x4xf32, #tpu.memory_space<vmem>>, vector<1x4xf32>
    %cst_38 = arith.constant dense<0.000000e+00> : vector<16x1xf32>
    %49 = tpu.matmul %47, %48, %cst_38 {dimension_numbers = #tpu.dot_dimension_numbers<[1], [1], [0], [0], [0, 0, 1, 0], [], []>} : vector<16x4xf32>, vector<1x4xf32>, vector<16x1xf32> -> vector<16x1xf32>
    %c0_39 = arith.constant 0 : index
    %c0_40 = arith.constant 0 : index
    %50 = vector.load %arg7[%c0_39, %c0_40] : memref<1x4xf32, #tpu.memory_space<vmem>>, vector<1x4xf32>
    %cst_41 = arith.constant dense<0.000000e+00> : vector<1x16xf32>
    %51 = tpu.matmul %50, %47, %cst_41 {dimension_numbers = #tpu.dot_dimension_numbers<[1], [1], [0], [0], [0, 0, 1, 0], [], []>} : vector<1x4xf32>, vector<16x4xf32>, vector<1x16xf32> -> vector<1x16xf32>
    %52 = vector.broadcast %49 : vector<16x1xf32> to vector<16x16xf32>
    %53 = vector.broadcast %51 : vector<1x16xf32> to vector<16x16xf32>
    %54 = arith.addf %52, %53 : vector<16x16xf32>
    %cst_42 = arith.constant 2.000000e-01 : f32
    %55 = vector.broadcast %cst_42 : f32 to vector<16x16xf32>
    %56 = arith.mulf %55, %54 : vector<16x16xf32>
    %57 = arith.maximumf %54, %56 : vector<16x16xf32>
    %58 = vector.extract_strided_slice %1 {offsets = [0, 0], sizes = [16, 16], strides = [1, 1]} : vector<16x128xf32> to vector<16x16xf32>
    %59 = arith.addf %57, %58 : vector<16x16xf32>
    %cst_43 = arith.constant dense<0xFF800000> : vector<16xf32>
    %60 = vector.multi_reduction <maximumf>, %59, %cst_43 [1] : vector<16x16xf32> to vector<16xf32>
    %61 = vector.shape_cast %60 : vector<16xf32> to vector<16x1xf32>
    %62 = vector.broadcast %61 : vector<16x1xf32> to vector<16x16xf32>
    %63 = arith.subf %59, %62 : vector<16x16xf32>
    %64 = math.exp %63 : vector<16x16xf32>
    %cst_44 = arith.constant dense<0.000000e+00> : vector<16xf32>
    %65 = vector.multi_reduction <add>, %64, %cst_44 [1] : vector<16x16xf32> to vector<16xf32>
    %66 = vector.shape_cast %65 : vector<16xf32> to vector<16x1xf32>
    %67 = tpu.reciprocal %66 {approx = true} : vector<16x1xf32> -> vector<16x1xf32>
    %68 = vector.broadcast %67 : vector<16x1xf32> to vector<16x16xf32>
    %69 = arith.mulf %64, %68 : vector<16x16xf32>
    %70 = arith.truncf %69 : vector<16x16xf32> to vector<16x16xbf16>
    %71 = arith.truncf %47 : vector<16x4xf32> to vector<16x4xbf16>
    %cst_45 = arith.constant dense<0.000000e+00> : vector<16x4xf32>
    %72 = tpu.matmul %70, %71, %cst_45 {dimension_numbers = #tpu.dot_dimension_numbers<[1], [0], [0], [1], [0, 0, 1, 1], [], []>} : vector<16x16xbf16>, vector<16x4xbf16>, vector<16x4xf32> -> vector<16x4xf32>
    %c0_46 = arith.constant 0 : index
    %c0_47 = arith.constant 0 : index
    %73 = vector.load %arg9[%c0_46, %c0_47] : memref<1x4xf32, #tpu.memory_space<vmem>>, vector<1x4xf32>
    %74 = vector.broadcast %73 : vector<1x4xf32> to vector<16x4xf32>
    %75 = arith.addf %72, %74 : vector<16x4xf32>
    %cst_48 = arith.constant dense<0xFF800000> : vector<16xf32>
    %76 = vector.multi_reduction <maximumf>, %75, %cst_48 [1] : vector<16x4xf32> to vector<16xf32>
    %77 = vector.shape_cast %76 : vector<16xf32> to vector<16x1xf32>
    %78 = vector.broadcast %77 : vector<16x1xf32> to vector<16x4xf32>
    %79 = arith.subf %75, %78 : vector<16x4xf32>
    %80 = math.exp %79 : vector<16x4xf32>
    %cst_49 = arith.constant dense<0.000000e+00> : vector<16xf32>
    %81 = vector.multi_reduction <add>, %80, %cst_49 [1] : vector<16x4xf32> to vector<16xf32>
    %82 = vector.shape_cast %81 : vector<16xf32> to vector<16x1xf32>
    %83 = math.log %82 : vector<16x1xf32>
    %84 = vector.broadcast %83 : vector<16x1xf32> to vector<16x4xf32>
    %85 = arith.subf %79, %84 : vector<16x4xf32>
    %c0_50 = arith.constant 0 : index
    %c0_51 = arith.constant 0 : index
    %86 = vector.load %arg16[%c0_50, %c0_51] : memref<16x4xf32, #tpu.memory_space<vmem>>, vector<16x4xf32>
    tpu.vector_store %arg16[%c0_50, %c0_51], %85 {strides = array<i32>} : memref<16x4xf32, #tpu.memory_space<vmem>>, vector<16x4xf32>,
    return
  }
  func.func @transform_0(%arg0: i32) -> (i32, i32) {
    %c0_i32 = arith.constant 0 : i32
    %c0_i32_0 = arith.constant 0 : i32
    %c0_i32_1 = arith.constant 0 : i32
    return %c0_i32, %c0_i32_0 : i32, i32
  }
  func.func @transform_1(%arg0: i32) -> (i32, i32) {
    %c0_i32 = arith.constant 0 : i32
    %c0_i32_0 = arith.constant 0 : i32
    %c0_i32_1 = arith.constant 0 : i32
    return %c0_i32, %c0_i32_0 : i32, i32
  }
  func.func @transform_2(%arg0: i32) -> (i32, i32) {
    %c0_i32 = arith.constant 0 : i32
    %c0_i32_0 = arith.constant 0 : i32
    %c0_i32_1 = arith.constant 0 : i32
    return %c0_i32, %c0_i32_0 : i32, i32
  }
  func.func @transform_3(%arg0: i32) -> (i32, i32) {
    %c0_i32 = arith.constant 0 : i32
    %c0_i32_0 = arith.constant 0 : i32
    %c0_i32_1 = arith.constant 0 : i32
    return %c0_i32, %c0_i32_0 : i32, i32
  }
  func.func @transform_4(%arg0: i32) -> (i32, i32) {
    %c0_i32 = arith.constant 0 : i32
    %c0_i32_0 = arith.constant 0 : i32
    %c0_i32_1 = arith.constant 0 : i32
    return %c0_i32, %c0_i32_0 : i32, i32
  }
  func.func @transform_5(%arg0: i32) -> (i32, i32) {
    %c0_i32 = arith.constant 0 : i32
    %c0_i32_0 = arith.constant 0 : i32
    %c0_i32_1 = arith.constant 0 : i32
    return %c0_i32, %c0_i32_0 : i32, i32
  }
  func.func @transform_6(%arg0: i32) -> (i32, i32) {
    %c0_i32 = arith.constant 0 : i32
    %c0_i32_0 = arith.constant 0 : i32
    %c0_i32_1 = arith.constant 0 : i32
    return %c0_i32, %c0_i32_0 : i32, i32
  }
  func.func @transform_7(%arg0: i32) -> (i32, i32) {
    %c0_i32 = arith.constant 0 : i32
    %c0_i32_0 = arith.constant 0 : i32
    %c0_i32_1 = arith.constant 0 : i32
    return %c0_i32, %c0_i32_0 : i32, i32
  }
  func.func @transform_8(%arg0: i32) -> (i32, i32) {
    %c0_i32 = arith.constant 0 : i32
    %c0_i32_0 = arith.constant 0 : i32
    %c0_i32_1 = arith.constant 0 : i32
    return %c0_i32, %c0_i32_0 : i32, i32
  }
  func.func @transform_9(%arg0: i32) -> (i32, i32) {
    %c0_i32 = arith.constant 0 : i32
    %c0_i32_0 = arith.constant 0 : i32
    %c0_i32_1 = arith.constant 0 : i32
    return %c0_i32, %c0_i32_0 : i32, i32
  }
  func.func @transform_10(%arg0: i32) -> (i32, i32) {
    %c0_i32 = arith.constant 0 : i32
    %c0_i32_0 = arith.constant 0 : i32
    %c0_i32_1 = arith.constant 0 : i32
    return %c0_i32, %c0_i32_0 : i32, i32
  }
  func.func @transform_11(%arg0: i32) -> (i32, i32) {
    %c0_i32 = arith.constant 0 : i32
    %c0_i32_0 = arith.constant 0 : i32
    %c0_i32_1 = arith.constant 0 : i32
    return %c0_i32, %c0_i32_0 : i32, i32
  }
  func.func @transform_12(%arg0: i32) -> (i32, i32) {
    %c0_i32 = arith.constant 0 : i32
    %c0_i32_0 = arith.constant 0 : i32
    %c0_i32_1 = arith.constant 0 : i32
    return %c0_i32, %c0_i32_0 : i32, i32
  }
  func.func @transform_13(%arg0: i32) -> (i32, i32) {
    %c0_i32 = arith.constant 0 : i32
    %c0_i32_0 = arith.constant 0 : i32
    %c0_i32_1 = arith.constant 0 : i32
    return %c0_i32, %c0_i32_0 : i32, i32
  }
  func.func @transform_14(%arg0: i32) -> (i32, i32) {
    %c0_i32 = arith.constant 0 : i32
    %c0_i32_0 = arith.constant 0 : i32
    %c0_i32_1 = arith.constant 0 : i32
    return %c0_i32, %c0_i32_0 : i32, i32
  }
  func.func @transform_15(%arg0: i32) -> (i32, i32) {
    %c0_i32 = arith.constant 0 : i32
    %c0_i32_0 = arith.constant 0 : i32
    %c0_i32_1 = arith.constant 0 : i32
    return %c0_i32, %c0_i32_0 : i32, i32
  }
}

</mosaic_0001>

<llo_original>
// kernel: tpu_custom_call.1
$region0: #{tpu_custom_call.1}
  #allocation0 [shape = 'u32[]', space=smem, size = 0x4, offset = 0x4, fixed_abs, tag = 'smem constant byte address 0x4 - core index']
  #allocation1 [shape = 'u32[144,128]{1,0:T(1,128)}', space=vmem, size = 0x12000, scoped, tag = 'internal scratch']
  %s0 = inlined_call_operand.vmem [shape: f32[16,16], index: 0, kind: input, shape index: {}]
  %s1 = inlined_call_operand.vmem [shape: bf16[16,64], index: 1, kind: input, shape index: {}]
  %s2 = inlined_call_operand.vmem [shape: f32[8,64], index: 2, kind: input, shape index: {}]
  %s3 = inlined_call_operand.vmem [shape: f32[8,64], index: 3, kind: input, shape index: {}]
  %s4 = inlined_call_operand.vmem [shape: f32[1,64], index: 4, kind: input, shape index: {}]
  %s5 = inlined_call_operand.vmem [shape: bf16[64,4], index: 5, kind: input, shape index: {}]
  %s6 = inlined_call_operand.vmem [shape: f32[1,4], index: 6, kind: input, shape index: {}]
  %s7 = inlined_call_operand.vmem [shape: f32[1,4], index: 7, kind: input, shape index: {}]
  %s8 = inlined_call_operand.vmem [shape: f32[1,4], index: 8, kind: input, shape index: {}]
  %s9 = inlined_call_operand.vmem [shape: bf16[16,128], index: 9, kind: input, shape index: {}]
  %s10 = inlined_call_operand.vmem [shape: f32[8,128], index: 10, kind: input, shape index: {}]
  %s11 = inlined_call_operand.vmem [shape: f32[128,8], index: 11, kind: input, shape index: {}]
  %s12 = inlined_call_operand.vmem [shape: f32[16,128], index: 12, kind: input, shape index: {}]
  %s13 = inlined_call_operand.vmem [shape: f32[128,16], index: 13, kind: input, shape index: {}]
  %s14 = inlined_call_operand.vmem [shape: f32[128,64], index: 14, kind: input, shape index: {}]
  %s15 = inlined_call_operand.vmem [shape: f32[16,4], index: 15, kind: output, shape index: {}]
  %s16 = sld [smem:[#allocation0]]
  $region70: #{tpu_custom_call.1} parent=0
    _
  %s18 = ssub.s32 1, %s16
  %s19 = scalar_select 0, %s18, %s16
  // Predicated region
  $region2: #{tpu_custom_call.1} parent=0 // pred_check
    _
  $region3: #{tpu_custom_call.1} parent=0 // pred_check_branch
    %21 = sbr.rel (0) target = $region5
  $region4: #{tpu_custom_call.1} parent=0 // pred_region
    _
  $region5: #{tpu_custom_call.1} parent=0 // pred_fallthru
    _
  // Predicated region
  $region6: #{tpu_custom_call.1} parent=0 // pred_check
    _
  $region7: #{tpu_custom_call.1} parent=0 // pred_check_branch
    %23 = sbr.rel (0) target = $region9
  $region8: #{tpu_custom_call.1} parent=0 // pred_region
    _
  $region9: #{tpu_custom_call.1} parent=0 // pred_fallthru
    _
  // Predicated region
  $region10: #{tpu_custom_call.1} parent=0 // pred_check
    _
  $region11: #{tpu_custom_call.1} parent=0 // pred_check_branch
    %25 = sbr.rel (0) target = $region13
  $region12: #{tpu_custom_call.1} parent=0 // pred_region
    _
  $region13: #{tpu_custom_call.1} parent=0 // pred_fallthru
    _
  // Predicated region
  $region14: #{tpu_custom_call.1} parent=0 // pred_check
    _
  $region15: #{tpu_custom_call.1} parent=0 // pred_check_branch
    %27 = sbr.rel (0) target = $region17
  $region16: #{tpu_custom_call.1} parent=0 // pred_region
    _
  $region17: #{tpu_custom_call.1} parent=0 // pred_fallthru
    _
  // Predicated region
  $region18: #{tpu_custom_call.1} parent=0 // pred_check
    _
  $region19: #{tpu_custom_call.1} parent=0 // pred_check_branch
    %29 = sbr.rel (0) target = $region21
  $region20: #{tpu_custom_call.1} parent=0 // pred_region
    _
  $region21: #{tpu_custom_call.1} parent=0 // pred_fallthru
    _
  // Predicated region
  $region22: #{tpu_custom_call.1} parent=0 // pred_check
    _
  $region23: #{tpu_custom_call.1} parent=0 // pred_check_branch
    %31 = sbr.rel (0) target = $region25
  $region24: #{tpu_custom_call.1} parent=0 // pred_region
    _
  $region25: #{tpu_custom_call.1} parent=0 // pred_fallthru
    _
  // Predicated region
  $region26: #{tpu_custom_call.1} parent=0 // pred_check
    _
  $region27: #{tpu_custom_call.1} parent=0 // pred_check_branch
    %33 = sbr.rel (0) target = $region29
  $region28: #{tpu_custom_call.1} parent=0 // pred_region
    _
  $region29: #{tpu_custom_call.1} parent=0 // pred_fallthru
    _
  // Predicated region
  $region30: #{tpu_custom_call.1} parent=0 // pred_check
    _
  $region31: #{tpu_custom_call.1} parent=0 // pred_check_branch
    %35 = sbr.rel (0) target = $region33
  $region32: #{tpu_custom_call.1} parent=0 // pred_region
    _
  $region33: #{tpu_custom_call.1} parent=0 // pred_fallthru
    _
  // Predicated region
  $region34: #{tpu_custom_call.1} parent=0 // pred_check
    _
  $region35: #{tpu_custom_call.1} parent=0 // pred_check_branch
    %37 = sbr.rel (0) target = $region37
  $region36: #{tpu_custom_call.1} parent=0 // pred_region
    _
  $region37: #{tpu_custom_call.1} parent=0 // pred_fallthru
    _
  // Predicated region
  $region38: #{tpu_custom_call.1} parent=0 // pred_check
    _
  $region39: #{tpu_custom_call.1} parent=0 // pred_check_branch
    %39 = sbr.rel (0) target = $region41
  $region40: #{tpu_custom_call.1} parent=0 // pred_region
    _
  $region41: #{tpu_custom_call.1} parent=0 // pred_fallthru
    _
  // Predicated region
  $region42: #{tpu_custom_call.1} parent=0 // pred_check
    _
  $region43: #{tpu_custom_call.1} parent=0 // pred_check_branch
    %41 = sbr.rel (0) target = $region45
  $region44: #{tpu_custom_call.1} parent=0 // pred_region
    _
  $region45: #{tpu_custom_call.1} parent=0 // pred_fallthru
    _
  // Predicated region
  $region46: #{tpu_custom_call.1} parent=0 // pred_check
    _
  $region47: #{tpu_custom_call.1} parent=0 // pred_check_branch
    %43 = sbr.rel (0) target = $region49
  $region48: #{tpu_custom_call.1} parent=0 // pred_region
    _
  $region49: #{tpu_custom_call.1} parent=0 // pred_fallthru
    _
  // Predicated region
  $region50: #{tpu_custom_call.1} parent=0 // pred_check
    _
  $region51: #{tpu_custom_call.1} parent=0 // pred_check_branch
    %45 = sbr.rel (0) target = $region53
  $region52: #{tpu_custom_call.1} parent=0 // pred_region
    _
  $region53: #{tpu_custom_call.1} parent=0 // pred_fallthru
    _
  // Predicated region
  $region54: #{tpu_custom_call.1} parent=0 // pred_check
    _
  $region55: #{tpu_custom_call.1} parent=0 // pred_check_branch
    %47 = sbr.rel (0) target = $region57
  $region56: #{tpu_custom_call.1} parent=0 // pred_region
    _
  $region57: #{tpu_custom_call.1} parent=0 // pred_fallthru
    _
  // Predicated region
  $region58: #{tpu_custom_call.1} parent=0 // pred_check
    _
  $region59: #{tpu_custom_call.1} parent=0 // pred_check_branch
    %49 = sbr.rel (0) target = $region61
  $region60: #{tpu_custom_call.1} parent=0 // pred_region
    _
  $region61: #{tpu_custom_call.1} parent=0 // pred_fallthru
    _
  %v51 = vld [vmem:[%s9] sm:$0xf]
  %v52 = vld [vmem:[%s9 + $0x4] sm:$0xf]
  %v53 = vunpack.c.l.bf16 %v51
  %v54 = vunpack.c.l.bf16 %v52
  %v55 = vld [vmem:[%s10] sm:$0xff]
  %v56 = vld [vmem:[%s11] sm:$0xff]
  %v57 = vld [vmem:[%s11 + $0x8] sm:$0xff]
  %v58 = vld [vmem:[%s11 + $0x10] sm:$0xff]
  %v59 = vld [vmem:[%s11 + $0x18] sm:$0xff]
  %v60 = vld [vmem:[%s11 + $0x20] sm:$0xff]
  %v61 = vld [vmem:[%s11 + $0x28] sm:$0xff]
  %v62 = vld [vmem:[%s11 + $0x30] sm:$0xff]
  %v63 = vld [vmem:[%s11 + $0x38] sm:$0xff]
  %v64 = vld [vmem:[%s11 + $0x40] sm:$0xff]
  %v65 = vld [vmem:[%s11 + $0x48] sm:$0xff]
  %v66 = vld [vmem:[%s11 + $0x50] sm:$0xff]
  %v67 = vld [vmem:[%s11 + $0x58] sm:$0xff]
  %v68 = vld [vmem:[%s11 + $0x60] sm:$0xff]
  %v69 = vld [vmem:[%s11 + $0x68] sm:$0xff]
  %v70 = vld [vmem:[%s11 + $0x70] sm:$0xff]
  %v71 = vld [vmem:[%s11 + $0x78] sm:$0xff]
  %v72 = vld [vmem:[%s12] sm:$0xff]
  %v73 = vld [vmem:[%s12 + $0x8] sm:$0xff]
  %v74 = vld [vmem:[%s13] sm:$0xff]
  %v75 = vld [vmem:[%s13 + $0x8] sm:$0xff]
  %v76 = vld [vmem:[%s13 + $0x10] sm:$0xff]
  %v77 = vld [vmem:[%s13 + $0x18] sm:$0xff]
  %v78 = vld [vmem:[%s13 + $0x20] sm:$0xff]
  %v79 = vld [vmem:[%s13 + $0x28] sm:$0xff]
  %v80 = vld [vmem:[%s13 + $0x30] sm:$0xff]
  %v81 = vld [vmem:[%s13 + $0x38] sm:$0xff]
  %v82 = vld [vmem:[%s13 + $0x40] sm:$0xff]
  %v83 = vld [vmem:[%s13 + $0x48] sm:$0xff]
  %v84 = vld [vmem:[%s13 + $0x50] sm:$0xff]
  %v85 = vld [vmem:[%s13 + $0x58] sm:$0xff]
  %v86 = vld [vmem:[%s13 + $0x60] sm:$0xff]
  %v87 = vld [vmem:[%s13 + $0x68] sm:$0xff]
  %v88 = vld [vmem:[%s13 + $0x70] sm:$0xff]
  %v89 = vld [vmem:[%s13 + $0x78] sm:$0xff]
  %v90 = vld [vmem:[%s14] sm:$0xff]
  %v91 = vld [vmem:[%s14 + $0x8] sm:$0xff]
  %v92 = vld [vmem:[%s14 + $0x10] sm:$0xff]
  %v93 = vld [vmem:[%s14 + $0x18] sm:$0xff]
  %v94 = vld [vmem:[%s14 + $0x20] sm:$0xff]
  %v95 = vld [vmem:[%s14 + $0x28] sm:$0xff]
  %v96 = vld [vmem:[%s14 + $0x30] sm:$0xff]
  %v97 = vld [vmem:[%s14 + $0x38] sm:$0xff]
  %v98 = vld [vmem:[%s14 + $0x40] sm:$0xff]
  %v99 = vld [vmem:[%s14 + $0x48] sm:$0xff]
  %v100 = vld [vmem:[%s14 + $0x50] sm:$0xff]
  %v101 = vld [vmem:[%s14 + $0x58] sm:$0xff]
  %v102 = vld [vmem:[%s14 + $0x60] sm:$0xff]
  %v103 = vld [vmem:[%s14 + $0x68] sm:$0xff]
  %v104 = vld [vmem:[%s14 + $0x70] sm:$0xff]
  %v105 = vld [vmem:[%s14 + $0x78] sm:$0xff]
  %v106 = vld [vmem:[%s0] sm:$0xff]
  %v107 = vld [vmem:[%s0 + $0x8] sm:$0xff]
  %v108 = vpack.c.bf16 %v107, %v106
  %v109 = vld [vmem:[%s1] sm:$0xf]
  %v110 = vld [vmem:[%s1 + $0x4] sm:$0xf]
  %v113 = vunpack.c.l.b16 %v109
  %v114 = vunpack.c.l.b16 %v110
  %v115 = vpack.c.b16 %v114, %v113
  %vm117 = vcmask 130048
  %v119 = vsel %vm117, %v108, 0
  %121 = vmatprep.subr.bf16.mxu0 0
  %122 = vmatpush1.bf16.msra.mxu0 %v115
  %123 = vmatprep.subr.bf16.mxu0 0
  %124 = vmatpush1.bf16.msra.mxu0 0
  %125 = vmatprep.subr.bf16.mxu0 0
  %126 = vmatpush1.bf16.msra.mxu0 0
  %127 = vmatprep.subr.bf16.mxu0 0
  %128 = vmatpush1.bf16.msra.mxu0 0
  %129 = vmatprep.subr.bf16.mxu0 0
  %130 = vmatpush1.bf16.msra.mxu0 0
  %131 = vmatprep.subr.bf16.mxu0 0
  %132 = vmatpush1.bf16.msra.mxu0 0
  %133 = vmatprep.subr.bf16.mxu0 0
  %134 = vmatpush1.bf16.msra.mxu0 0
  %135 = vmatprep.subr.bf16.mxu0 0
  %136 = vmatpush1.bf16.msra.mxu0 0
  %137 = vmatprep.subr.bf16.mxu0 0
  %138 = vmatpush1.bf16.msra.mxu0 0
  %139 = vmatprep.subr.bf16.mxu0 0
  %140 = vmatpush1.bf16.msra.mxu0 0
  %141 = vmatprep.subr.bf16.mxu0 0
  %142 = vmatpush1.bf16.msra.mxu0 0
  %143 = vmatprep.subr.bf16.mxu0 0
  %144 = vmatpush1.bf16.msra.mxu0 0
  %145 = vmatprep.subr.bf16.mxu0 0
  %146 = vmatpush1.bf16.msra.mxu0 0
  %147 = vmatprep.subr.bf16.mxu0 0
  %148 = vmatpush1.bf16.msra.mxu0 0
  %149 = vmatprep.subr.bf16.mxu0 0
  %150 = vmatpush1.bf16.msra.mxu0 0
  %151 = vmatprep.subr.bf16.mxu0 0
  %152 = vmatpush1.bf16.msra.mxu0 0
  %153 = vmatprep.mubr.bf16.mxu0 0
  %154 = vmatmul.mubr.bf16.gmra.mrb[0].mxu0 %v119
  %v155 = vpop.f32.mrb[0].mxu0
  %v156 = vadd.f32 0.0, %v155
  %v157 = vpop.f32.mrb[0].mxu0
  %v158 = vpop.f32.mrb[0].mxu0
  %v159 = vadd.f32 0.0, %v158
  %v160 = vpop.f32.mrb[0].mxu0
  %161 = vdwg.mxu0
  %v162 = vld [vmem:[%s3] sm:$0xff]
  %vm163 = vcmask 523264
  %v165 = vsel %vm163, %v156, 0
  %v168 = vsel %vm163, %v159, 0
  %v171 = vsel %vm163, %v162, 0
  %173 = vmatprep.subr.mxu0 0.0
  %174 = vmatpush1.xpose.msra.mxu0 %v171
  %175 = vmatprep.subr.mxu0 0.0
  %176 = vmatpush1.xpose.msra.mxu0 0.0
  %177 = vmatprep.subr.mxu0 0.0
  %178 = vmatpush1.xpose.msra.mxu0 0.0
  %179 = vmatprep.subr.mxu0 0.0
  %180 = vmatpush1.xpose.msra.mxu0 0.0
  %181 = vmatprep.subr.mxu0 0.0
  %182 = vmatpush1.xpose.msra.mxu0 0.0
  %183 = vmatprep.subr.mxu0 0.0
  %184 = vmatpush1.xpose.msra.mxu0 0.0
  %185 = vmatprep.subr.mxu0 0.0
  %186 = vmatpush1.xpose.msra.mxu0 0.0
  %187 = vmatprep.subr.mxu0 0.0
  %188 = vmatpush1.xpose.msra.mxu0 0.0
  %189 = vmatprep.subr.mxu0 0.0
  %190 = vmatpush1.xpose.msra.mxu0 0.0
  %191 = vmatprep.subr.mxu0 0.0
  %192 = vmatpush1.xpose.msra.mxu0 0.0
  %193 = vmatprep.subr.mxu0 0.0
  %194 = vmatpush1.xpose.msra.mxu0 0.0
  %195 = vmatprep.subr.mxu0 0.0
  %196 = vmatpush1.xpose.msra.mxu0 0.0
  %197 = vmatprep.subr.mxu0 0.0
  %198 = vmatpush1.xpose.msra.mxu0 0.0
  %199 = vmatprep.subr.mxu0 0.0
  %200 = vmatpush1.xpose.msra.mxu0 0.0
  %201 = vmatprep.subr.mxu0 0.0
  %202 = vmatpush1.xpose.msra.mxu0 0.0
  %203 = vmatprep.subr.mxu0 0.0
  %204 = vmatpush1.xpose.msra.mxu0 0.0
  %205 = vmatprep.subr.mxu0 0.0
  %206 = vmatpush1.xpose.msra.mxu0 0.0
  %207 = vmatprep.subr.mxu0 0.0
  %208 = vmatpush1.xpose.msra.mxu0 0.0
  %209 = vmatprep.subr.mxu0 0.0
  %210 = vmatpush1.xpose.msra.mxu0 0.0
  %211 = vmatprep.subr.mxu0 0.0
  %212 = vmatpush1.xpose.msra.mxu0 0.0
  %213 = vmatprep.subr.mxu0 0.0
  %214 = vmatpush1.xpose.msra.mxu0 0.0
  %215 = vmatprep.subr.mxu0 0.0
  %216 = vmatpush1.xpose.msra.mxu0 0.0
  %217 = vmatprep.subr.mxu0 0.0
  %218 = vmatpush1.xpose.msra.mxu0 0.0
  %219 = vmatprep.subr.mxu0 0.0
  %220 = vmatpush1.xpose.msra.mxu0 0.0
  %221 = vmatprep.subr.mxu0 0.0
  %222 = vmatpush1.xpose.msra.mxu0 0.0
  %223 = vmatprep.subr.mxu0 0.0
  %224 = vmatpush1.xpose.msra.mxu0 0.0
  %225 = vmatprep.subr.mxu0 0.0
  %226 = vmatpush1.xpose.msra.mxu0 0.0
  %227 = vmatprep.subr.mxu0 0.0
  %228 = vmatpush1.xpose.msra.mxu0 0.0
  %229 = vmatprep.subr.mxu0 0.0
  %230 = vmatpush1.xpose.msra.mxu0 0.0
  %231 = vmatprep.subr.mxu0 0.0
  %232 = vmatpush1.xpose.msra.mxu0 0.0
  %233 = vmatprep.subr.mxu0 0.0
  %234 = vmatpush1.xpose.msra.mxu0 0.0
  %235 = vmatprep.subr.mxu0 0.0
  %236 = vmatpush1.xpose.msra.mxu0 0.0
  %237 = vmatprep.mubr.f32.mxu0 0.0
  %238 = vmatmul.mubr.f32.gmra.mrb[0].mxu0 %v165
  %v239 = vpop.f32.mrb[0].mxu0
  %v240 = vadd.f32 0.0, %v239
  %v241 = vpop.f32.mrb[0].mxu0
  %242 = vmatprep.mubr.f32.mxu0 0.0
  %243 = vmatmul.mubr.f32.gmra.mrb[0].mxu0 %v168
  %v244 = vpop.f32.mrb[0].mxu0
  %v245 = vadd.f32 0.0, %v244
  %v246 = vpop.f32.mrb[0].mxu0
  %247 = vdwg.mxu0
  %v248 = vld [vmem:[%s2] sm:$0xff]
  %v250 = vsel %vm163, %v248, 0
  %252 = vmatprep.subr.mxu0 0.0
  %253 = vmatpush1.xpose.msra.mxu0 %v165
  %254 = vmatprep.subr.mxu0 0.0
  %255 = vmatpush1.xpose.msra.mxu0 %v168
  %256 = vmatprep.subr.mxu0 0.0
  %257 = vmatpush1.xpose.msra.mxu0 0.0
  %258 = vmatprep.subr.mxu0 0.0
  %259 = vmatpush1.xpose.msra.mxu0 0.0
  %260 = vmatprep.subr.mxu0 0.0
  %261 = vmatpush1.xpose.msra.mxu0 0.0
  %262 = vmatprep.subr.mxu0 0.0
  %263 = vmatpush1.xpose.msra.mxu0 0.0
  %264 = vmatprep.subr.mxu0 0.0
  %265 = vmatpush1.xpose.msra.mxu0 0.0
  %266 = vmatprep.subr.mxu0 0.0
  %267 = vmatpush1.xpose.msra.mxu0 0.0
  %268 = vmatprep.subr.mxu0 0.0
  %269 = vmatpush1.xpose.msra.mxu0 0.0
  %270 = vmatprep.subr.mxu0 0.0
  %271 = vmatpush1.xpose.msra.mxu0 0.0
  %272 = vmatprep.subr.mxu0 0.0
  %273 = vmatpush1.xpose.msra.mxu0 0.0
  %274 = vmatprep.subr.mxu0 0.0
  %275 = vmatpush1.xpose.msra.mxu0 0.0
  %276 = vmatprep.subr.mxu0 0.0
  %277 = vmatpush1.xpose.msra.mxu0 0.0
  %278 = vmatprep.subr.mxu0 0.0
  %279 = vmatpush1.xpose.msra.mxu0 0.0
  %280 = vmatprep.subr.mxu0 0.0
  %281 = vmatpush1.xpose.msra.mxu0 0.0
  %282 = vmatprep.subr.mxu0 0.0
  %283 = vmatpush1.xpose.msra.mxu0 0.0
  %284 = vmatprep.subr.mxu0 0.0
  %285 = vmatpush1.xpose.msra.mxu0 0.0
  %286 = vmatprep.subr.mxu0 0.0
  %287 = vmatpush1.xpose.msra.mxu0 0.0
  %288 = vmatprep.subr.mxu0 0.0
  %289 = vmatpush1.xpose.msra.mxu0 0.0
  %290 = vmatprep.subr.mxu0 0.0
  %291 = vmatpush1.xpose.msra.mxu0 0.0
  %292 = vmatprep.subr.mxu0 0.0
  %293 = vmatpush1.xpose.msra.mxu0 0.0
  %294 = vmatprep.subr.mxu0 0.0
  %295 = vmatpush1.xpose.msra.mxu0 0.0
  %296 = vmatprep.subr.mxu0 0.0
  %297 = vmatpush1.xpose.msra.mxu0 0.0
  %298 = vmatprep.subr.mxu0 0.0
  %299 = vmatpush1.xpose.msra.mxu0 0.0
  %300 = vmatprep.subr.mxu0 0.0
  %301 = vmatpush1.xpose.msra.mxu0 0.0
  %302 = vmatprep.subr.mxu0 0.0
  %303 = vmatpush1.xpose.msra.mxu0 0.0
  %304 = vmatprep.subr.mxu0 0.0
  %305 = vmatpush1.xpose.msra.mxu0 0.0
  %306 = vmatprep.subr.mxu0 0.0
  %307 = vmatpush1.xpose.msra.mxu0 0.0
  %308 = vmatprep.subr.mxu0 0.0
  %309 = vmatpush1.xpose.msra.mxu0 0.0
  %310 = vmatprep.subr.mxu0 0.0
  %311 = vmatpush1.xpose.msra.mxu0 0.0
  %312 = vmatprep.subr.mxu0 0.0
  %313 = vmatpush1.xpose.msra.mxu0 0.0
  %314 = vmatprep.subr.mxu0 0.0
  %315 = vmatpush1.xpose.msra.mxu0 0.0
  %316 = vmatprep.mubr.f32.mxu0 0.0
  %317 = vmatmul.mubr.f32.gmra.mrb[0].mxu0 %v250
  %v318 = vpop.f32.mrb[0].mxu0
  %v319 = vadd.f32 0.0, %v318
  %v320 = vpop.f32.mrb[0].mxu0
  %321 = vdwg.mxu0
  %v323 = vsel %vm117, %v319, 0
  %325 = vmatprep.subr.mxu0 0.0
  %326 = vmatpush1.msra.mxu0 %v72
  %327 = vmatprep.subr.mxu0 0.0
  %328 = vmatpush1.msra.mxu0 %v73
  %329 = vmatprep.subr.mxu0 0.0
  %330 = vmatpush1.msra.mxu0 0.0
  %331 = vmatprep.subr.mxu0 0.0
  %332 = vmatpush1.msra.mxu0 0.0
  %333 = vmatprep.subr.mxu0 0.0
  %334 = vmatpush1.msra.mxu0 0.0
  %335 = vmatprep.subr.mxu0 0.0
  %336 = vmatpush1.msra.mxu0 0.0
  %337 = vmatprep.subr.mxu0 0.0
  %338 = vmatpush1.msra.mxu0 0.0
  %339 = vmatprep.subr.mxu0 0.0
  %340 = vmatpush1.msra.mxu0 0.0
  %341 = vmatprep.subr.mxu0 0.0
  %342 = vmatpush1.msra.mxu0 0.0
  %343 = vmatprep.subr.mxu0 0.0
  %344 = vmatpush1.msra.mxu0 0.0
  %345 = vmatprep.subr.mxu0 0.0
  %346 = vmatpush1.msra.mxu0 0.0
  %347 = vmatprep.subr.mxu0 0.0
  %348 = vmatpush1.msra.mxu0 0.0
  %349 = vmatprep.subr.mxu0 0.0
  %350 = vmatpush1.msra.mxu0 0.0
  %351 = vmatprep.subr.mxu0 0.0
  %352 = vmatpush1.msra.mxu0 0.0
  %353 = vmatprep.subr.mxu0 0.0
  %354 = vmatpush1.msra.mxu0 0.0
  %355 = vmatprep.subr.mxu0 0.0
  %356 = vmatpush1.msra.mxu0 0.0
  %357 = vmatprep.subr.mxu0 0.0
  %358 = vmatpush1.msra.mxu0 0.0
  %359 = vmatprep.subr.mxu0 0.0
  %360 = vmatpush1.msra.mxu0 0.0
  %361 = vmatprep.subr.mxu0 0.0
  %362 = vmatpush1.msra.mxu0 0.0
  %363 = vmatprep.subr.mxu0 0.0
  %364 = vmatpush1.msra.mxu0 0.0
  %365 = vmatprep.subr.mxu0 0.0
  %366 = vmatpush1.msra.mxu0 0.0
  %367 = vmatprep.subr.mxu0 0.0
  %368 = vmatpush1.msra.mxu0 0.0
  %369 = vmatprep.subr.mxu0 0.0
  %370 = vmatpush1.msra.mxu0 0.0
  %371 = vmatprep.subr.mxu0 0.0
  %372 = vmatpush1.msra.mxu0 0.0
  %373 = vmatprep.subr.mxu0 0.0
  %374 = vmatpush1.msra.mxu0 0.0
  %375 = vmatprep.subr.mxu0 0.0
  %376 = vmatpush1.msra.mxu0 0.0
  %377 = vmatprep.subr.mxu0 0.0
  %378 = vmatpush1.msra.mxu0 0.0
  %379 = vmatprep.subr.mxu0 0.0
  %380 = vmatpush1.msra.mxu0 0.0
  %381 = vmatprep.subr.mxu0 0.0
  %382 = vmatpush1.msra.mxu0 0.0
  %383 = vmatprep.subr.mxu0 0.0
  %384 = vmatpush1.msra.mxu0 0.0
  %385 = vmatprep.subr.mxu0 0.0
  %386 = vmatpush1.msra.mxu0 0.0
  %387 = vmatprep.subr.mxu0 0.0
  %388 = vmatpush1.msra.mxu0 0.0
  %389 = vmatprep.mubr.f32.mxu0 0.0
  %390 = vmatmul.mubr.f32.gmra.mrb[0].mxu0 %v323
  %v391 = vpop.f32.mrb[0].mxu0
  %v392 = vadd.f32 0.0, %v391
  %v393 = vpop.f32.mrb[0].mxu0
  %394 = vdwg.mxu0
  %v395 = vmul.f32 %v392, %v55
  %v396 = vrot.slane %v395, 4
  %v397 = vadd.f32 %v395, %v396
  %v398 = vrot.slane %v397, 2
  %v399 = vadd.f32 %v397, %v398
  %v400 = vrot.slane %v399, 1
  %v401 = vadd.f32 %v399, %v400
  %vm402 = vcmask 64512
  %v404 = vsel %vm402, %v240, 0
  %v407 = vsel %vm402, %v245, 0
  %409 = vmatprep.subr.mxu0 0.0
  %410 = vmatpush1.msra.mxu0 %v55
  %411 = vmatprep.subr.mxu0 0.0
  %412 = vmatpush1.msra.mxu0 0.0
  %413 = vmatprep.subr.mxu0 0.0
  %414 = vmatpush1.msra.mxu0 0.0
  %415 = vmatprep.subr.mxu0 0.0
  %416 = vmatpush1.msra.mxu0 0.0
  %417 = vmatprep.subr.mxu0 0.0
  %418 = vmatpush1.msra.mxu0 0.0
  %419 = vmatprep.subr.mxu0 0.0
  %420 = vmatpush1.msra.mxu0 0.0
  %421 = vmatprep.subr.mxu0 0.0
  %422 = vmatpush1.msra.mxu0 0.0
  %423 = vmatprep.subr.mxu0 0.0
  %424 = vmatpush1.msra.mxu0 0.0
  %425 = vmatprep.subr.mxu0 0.0
  %426 = vmatpush1.msra.mxu0 0.0
  %427 = vmatprep.subr.mxu0 0.0
  %428 = vmatpush1.msra.mxu0 0.0
  %429 = vmatprep.subr.mxu0 0.0
  %430 = vmatpush1.msra.mxu0 0.0
  %431 = vmatprep.subr.mxu0 0.0
  %432 = vmatpush1.msra.mxu0 0.0
  %433 = vmatprep.subr.mxu0 0.0
  %434 = vmatpush1.msra.mxu0 0.0
  %435 = vmatprep.subr.mxu0 0.0
  %436 = vmatpush1.msra.mxu0 0.0
  %437 = vmatprep.subr.mxu0 0.0
  %438 = vmatpush1.msra.mxu0 0.0
  %439 = vmatprep.subr.mxu0 0.0
  %440 = vmatpush1.msra.mxu0 0.0
  %441 = vmatprep.subr.mxu0 0.0
  %442 = vmatpush1.msra.mxu0 0.0
  %443 = vmatprep.subr.mxu0 0.0
  %444 = vmatpush1.msra.mxu0 0.0
  %445 = vmatprep.subr.mxu0 0.0
  %446 = vmatpush1.msra.mxu0 0.0
  %447 = vmatprep.subr.mxu0 0.0
  %448 = vmatpush1.msra.mxu0 0.0
  %449 = vmatprep.subr.mxu0 0.0
  %450 = vmatpush1.msra.mxu0 0.0
  %451 = vmatprep.subr.mxu0 0.0
  %452 = vmatpush1.msra.mxu0 0.0
  %453 = vmatprep.subr.mxu0 0.0
  %454 = vmatpush1.msra.mxu0 0.0
  %455 = vmatprep.subr.mxu0 0.0
  %456 = vmatpush1.msra.mxu0 0.0
  %457 = vmatprep.subr.mxu0 0.0
  %458 = vmatpush1.msra.mxu0 0.0
  %459 = vmatprep.subr.mxu0 0.0
  %460 = vmatpush1.msra.mxu0 0.0
  %461 = vmatprep.subr.mxu0 0.0
  %462 = vmatpush1.msra.mxu0 0.0
  %463 = vmatprep.subr.mxu0 0.0
  %464 = vmatpush1.msra.mxu0 0.0
  %465 = vmatprep.subr.mxu0 0.0
  %466 = vmatpush1.msra.mxu0 0.0
  %467 = vmatprep.subr.mxu0 0.0
  %468 = vmatpush1.msra.mxu0 0.0
  %469 = vmatprep.subr.mxu0 0.0
  %470 = vmatpush1.msra.mxu0 0.0
  %471 = vmatprep.subr.mxu0 0.0
  %472 = vmatpush1.msra.mxu0 0.0
  %473 = vmatprep.mubr.f32.mxu0 0.0
  %474 = vmatmul.mubr.f32.gmra.mrb[0].mxu0 %v404
  %v475 = vpop.f32.mrb[0].mxu0
  %v476 = vadd.f32 %v401, %v475
  %v477 = vpop.f32.mrb[0].mxu0
  %478 = vmatprep.mubr.f32.mxu0 0.0
  %479 = vmatmul.mubr.f32.gmra.mrb[0].mxu0 %v407
  %v480 = vpop.f32.mrb[0].mxu0
  %v481 = vadd.f32 %v401, %v480
  %v482 = vpop.f32.mrb[0].mxu0
  %483 = vdwg.mxu0
  %v484 = vmul.f32 %v476, 0.2
  %v485 = vmul.f32 %v481, 0.2
  %v486 = vmax.f32 %v476, %v484
  %v487 = vmax.f32 %v481, %v485
  %v488 = vadd.f32 %v486, %v53
  %v489 = vadd.f32 %v487, %v54
  %490 = vmax.xlane.f32.xlu0 %v488
  %v491 = vpop.xlane.xlu0 %490
  %492 = vmax.xlane.f32.xlu0 %v489
  %v493 = vpop.xlane.xlu0 %492
  %v494 = vsub.f32 %v488, %v491
  %v495 = vsub.f32 %v489, %v493
  %v496 = vmul.f32 %v494, 1.442695
  %v497 = vpow.pop %v496
  %v498 = vmul.f32 %v495, 1.442695
  %v499 = vpow.pop %v498
  %500 = vmatprep.subr.mxu0 0.0
  %501 = vmatpush1.msra.mxu0 %v56
  %502 = vmatprep.subr.mxu0 0.0
  %503 = vmatpush1.msra.mxu0 %v57
  %504 = vmatprep.subr.mxu0 0.0
  %505 = vmatpush1.msra.mxu0 %v58
  %506 = vmatprep.subr.mxu0 0.0
  %507 = vmatpush1.msra.mxu0 %v59
  %508 = vmatprep.subr.mxu0 0.0
  %509 = vmatpush1.msra.mxu0 %v60
  %510 = vmatprep.subr.mxu0 0.0
  %511 = vmatpush1.msra.mxu0 %v61
  %512 = vmatprep.subr.mxu0 0.0
  %513 = vmatpush1.msra.mxu0 %v62
  %514 = vmatprep.subr.mxu0 0.0
  %515 = vmatpush1.msra.mxu0 %v63
  %516 = vmatprep.subr.mxu0 0.0
  %517 = vmatpush1.msra.mxu0 %v64
  %518 = vmatprep.subr.mxu0 0.0
  %519 = vmatpush1.msra.mxu0 %v65
  %520 = vmatprep.subr.mxu0 0.0
  %521 = vmatpush1.msra.mxu0 %v66
  %522 = vmatprep.subr.mxu0 0.0
  %523 = vmatpush1.msra.mxu0 %v67
  %524 = vmatprep.subr.mxu0 0.0
  %525 = vmatpush1.msra.mxu0 %v68
  %526 = vmatprep.subr.mxu0 0.0
  %527 = vmatpush1.msra.mxu0 %v69
  %528 = vmatprep.subr.mxu0 0.0
  %529 = vmatpush1.msra.mxu0 %v70
  %530 = vmatprep.subr.mxu0 0.0
  %531 = vmatpush1.msra.mxu0 %v71
  %532 = vmatprep.subr.mxu0 0.0
  %533 = vmatpush1.msra.mxu0 0.0
  %534 = vmatprep.subr.mxu0 0.0
  %535 = vmatpush1.msra.mxu0 0.0
  %536 = vmatprep.subr.mxu0 0.0
  %537 = vmatpush1.msra.mxu0 0.0
  %538 = vmatprep.subr.mxu0 0.0
  %539 = vmatpush1.msra.mxu0 0.0
  %540 = vmatprep.subr.mxu0 0.0
  %541 = vmatpush1.msra.mxu0 0.0
  %542 = vmatprep.subr.mxu0 0.0
  %543 = vmatpush1.msra.mxu0 0.0
  %544 = vmatprep.subr.mxu0 0.0
  %545 = vmatpush1.msra.mxu0 0.0
  %546 = vmatprep.subr.mxu0 0.0
  %547 = vmatpush1.msra.mxu0 0.0
  %548 = vmatprep.subr.mxu0 0.0
  %549 = vmatpush1.msra.mxu0 0.0
  %550 = vmatprep.subr.mxu0 0.0
  %551 = vmatpush1.msra.mxu0 0.0
  %552 = vmatprep.subr.mxu0 0.0
  %553 = vmatpush1.msra.mxu0 0.0
  %554 = vmatprep.subr.mxu0 0.0
  %555 = vmatpush1.msra.mxu0 0.0
  %556 = vmatprep.subr.mxu0 0.0
  %557 = vmatpush1.msra.mxu0 0.0
  %558 = vmatprep.subr.mxu0 0.0
  %559 = vmatpush1.msra.mxu0 0.0
  %560 = vmatprep.subr.mxu0 0.0
  %561 = vmatpush1.msra.mxu0 0.0
  %562 = vmatprep.subr.mxu0 0.0
  %563 = vmatpush1.msra.mxu0 0.0
  %564 = vmatprep.mubr.f32.mxu0 0.0
  %565 = vmatmul.mubr.f32.gmra.mrb[0].mxu0 %v497
  %v566 = vpop.f32.mrb[0].mxu0
  %v567 = vadd.f32 0.0, %v566
  %v568 = vpop.f32.mrb[0].mxu0
  %569 = vmatprep.mubr.f32.mxu0 0.0
  %570 = vmatmul.mubr.f32.gmra.mrb[0].mxu0 %v499
  %v571 = vpop.f32.mrb[0].mxu0
  %v572 = vadd.f32 0.0, %v571
  %v573 = vpop.f32.mrb[0].mxu0
  %574 = vdwg.mxu0
  %v575 = vrcp.pop %v567
  %v576 = vrcp.pop %v572
  %v578 = vsel %vm402, %v575, 0
  %v581 = vsel %vm402, %v576, 0
  %583 = vmatprep.subr.mxu0 0.0
  %584 = vmatpush1.msra.mxu0 %v55
  %585 = vmatprep.subr.mxu0 0.0
  %586 = vmatpush1.msra.mxu0 0.0
  %587 = vmatprep.subr.mxu0 0.0
  %588 = vmatpush1.msra.mxu0 0.0
  %589 = vmatprep.subr.mxu0 0.0
  %590 = vmatpush1.msra.mxu0 0.0
  %591 = vmatprep.subr.mxu0 0.0
  %592 = vmatpush1.msra.mxu0 0.0
  %593 = vmatprep.subr.mxu0 0.0
  %594 = vmatpush1.msra.mxu0 0.0
  %595 = vmatprep.subr.mxu0 0.0
  %596 = vmatpush1.msra.mxu0 0.0
  %597 = vmatprep.subr.mxu0 0.0
  %598 = vmatpush1.msra.mxu0 0.0
  %599 = vmatprep.subr.mxu0 0.0
  %600 = vmatpush1.msra.mxu0 0.0
  %601 = vmatprep.subr.mxu0 0.0
  %602 = vmatpush1.msra.mxu0 0.0
  %603 = vmatprep.subr.mxu0 0.0
  %604 = vmatpush1.msra.mxu0 0.0
  %605 = vmatprep.subr.mxu0 0.0
  %606 = vmatpush1.msra.mxu0 0.0
  %607 = vmatprep.subr.mxu0 0.0
  %608 = vmatpush1.msra.mxu0 0.0
  %609 = vmatprep.subr.mxu0 0.0
  %610 = vmatpush1.msra.mxu0 0.0
  %611 = vmatprep.subr.mxu0 0.0
  %612 = vmatpush1.msra.mxu0 0.0
  %613 = vmatprep.subr.mxu0 0.0
  %614 = vmatpush1.msra.mxu0 0.0
  %615 = vmatprep.subr.mxu0 0.0
  %616 = vmatpush1.msra.mxu0 0.0
  %617 = vmatprep.subr.mxu0 0.0
  %618 = vmatpush1.msra.mxu0 0.0
  %619 = vmatprep.subr.mxu0 0.0
  %620 = vmatpush1.msra.mxu0 0.0
  %621 = vmatprep.subr.mxu0 0.0
  %622 = vmatpush1.msra.mxu0 0.0
  %623 = vmatprep.subr.mxu0 0.0
  %624 = vmatpush1.msra.mxu0 0.0
  %625 = vmatprep.subr.mxu0 0.0
  %626 = vmatpush1.msra.mxu0 0.0
  %627 = vmatprep.subr.mxu0 0.0
  %628 = vmatpush1.msra.mxu0 0.0
  %629 = vmatprep.subr.mxu0 0.0
  %630 = vmatpush1.msra.mxu0 0.0
  %631 = vmatprep.subr.mxu0 0.0
  %632 = vmatpush1.msra.mxu0 0.0
  %633 = vmatprep.subr.mxu0 0.0
  %634 = vmatpush1.msra.mxu0 0.0
  %635 = vmatprep.subr.mxu0 0.0
  %636 = vmatpush1.msra.mxu0 0.0
  %637 = vmatprep.subr.mxu0 0.0
  %638 = vmatpush1.msra.mxu0 0.0
  %639 = vmatprep.subr.mxu0 0.0
  %640 = vmatpush1.msra.mxu0 0.0
  %641 = vmatprep.subr.mxu0 0.0
  %642 = vmatpush1.msra.mxu0 0.0
  %643 = vmatprep.subr.mxu0 0.0
  %644 = vmatpush1.msra.mxu0 0.0
  %645 = vmatprep.subr.mxu0 0.0
  %646 = vmatpush1.msra.mxu0 0.0
  %647 = vmatprep.mubr.f32.mxu0 0.0
  %648 = vmatmul.mubr.f32.gmra.mrb[0].mxu0 %v578
  %v649 = vpop.f32.mrb[0].mxu0
  %v650 = vadd.f32 0.0, %v649
  %v651 = vpop.f32.mrb[0].mxu0
  %652 = vmatprep.mubr.f32.mxu0 0.0
  %653 = vmatmul.mubr.f32.gmra.mrb[0].mxu0 %v581
  %v654 = vpop.f32.mrb[0].mxu0
  %v655 = vadd.f32 0.0, %v654
  %v656 = vpop.f32.mrb[0].mxu0
  %657 = vdwg.mxu0
  %v658 = vmul.f32 %v497, %v650
  %v659 = vmul.f32 %v499, %v655
  %v661 = vsel %vm117, %v74, 0
  %v664 = vsel %vm117, %v75, 0
  %v667 = vsel %vm117, %v76, 0
  %v670 = vsel %vm117, %v77, 0
  %v673 = vsel %vm117, %v78, 0
  %v676 = vsel %vm117, %v79, 0
  %v679 = vsel %vm117, %v80, 0
  %v682 = vsel %vm117, %v81, 0
  %v685 = vsel %vm117, %v82, 0
  %v688 = vsel %vm117, %v83, 0
  %v691 = vsel %vm117, %v84, 0
  %v694 = vsel %vm117, %v85, 0
  %v697 = vsel %vm117, %v86, 0
  %v700 = vsel %vm117, %v87, 0
  %v703 = vsel %vm117, %v88, 0
  %v706 = vsel %vm117, %v89, 0
  %708 = vmatprep.subr.mxu0 0.0
  %709 = vmatpush1.msra.mxu0 %v156
  %710 = vmatprep.subr.mxu0 0.0
  %711 = vmatpush1.msra.mxu0 %v159
  %712 = vmatprep.subr.mxu0 0.0
  %713 = vmatpush1.msra.mxu0 0.0
  %714 = vmatprep.subr.mxu0 0.0
  %715 = vmatpush1.msra.mxu0 0.0
  %716 = vmatprep.subr.mxu0 0.0
  %717 = vmatpush1.msra.mxu0 0.0
  %718 = vmatprep.subr.mxu0 0.0
  %719 = vmatpush1.msra.mxu0 0.0
  %720 = vmatprep.subr.mxu0 0.0
  %721 = vmatpush1.msra.mxu0 0.0
  %722 = vmatprep.subr.mxu0 0.0
  %723 = vmatpush1.msra.mxu0 0.0
  %724 = vmatprep.subr.mxu0 0.0
  %725 = vmatpush1.msra.mxu0 0.0
  %726 = vmatprep.subr.mxu0 0.0
  %727 = vmatpush1.msra.mxu0 0.0
  %728 = vmatprep.subr.mxu0 0.0
  %729 = vmatpush1.msra.mxu0 0.0
  %730 = vmatprep.subr.mxu0 0.0
  %731 = vmatpush1.msra.mxu0 0.0
  %732 = vmatprep.subr.mxu0 0.0
  %733 = vmatpush1.msra.mxu0 0.0
  %734 = vmatprep.subr.mxu0 0.0
  %735 = vmatpush1.msra.mxu0 0.0
  %736 = vmatprep.subr.mxu0 0.0
  %737 = vmatpush1.msra.mxu0 0.0
  %738 = vmatprep.subr.mxu0 0.0
  %739 = vmatpush1.msra.mxu0 0.0
  %740 = vmatprep.subr.mxu0 0.0
  %741 = vmatpush1.msra.mxu0 0.0
  %742 = vmatprep.subr.mxu0 0.0
  %743 = vmatpush1.msra.mxu0 0.0
  %744 = vmatprep.subr.mxu0 0.0
  %745 = vmatpush1.msra.mxu0 0.0
  %746 = vmatprep.subr.mxu0 0.0
  %747 = vmatpush1.msra.mxu0 0.0
  %748 = vmatprep.subr.mxu0 0.0
  %749 = vmatpush1.msra.mxu0 0.0
  %750 = vmatprep.subr.mxu0 0.0
  %751 = vmatpush1.msra.mxu0 0.0
  %752 = vmatprep.subr.mxu0 0.0
  %753 = vmatpush1.msra.mxu0 0.0
  %754 = vmatprep.subr.mxu0 0.0
  %755 = vmatpush1.msra.mxu0 0.0
  %756 = vmatprep.subr.mxu0 0.0
  %757 = vmatpush1.msra.mxu0 0.0
  %758 = vmatprep.subr.mxu0 0.0
  %759 = vmatpush1.msra.mxu0 0.0
  %760 = vmatprep.subr.mxu0 0.0
  %761 = vmatpush1.msra.mxu0 0.0
  %762 = vmatprep.subr.mxu0 0.0
  %763 = vmatpush1.msra.mxu0 0.0
  %764 = vmatprep.subr.mxu0 0.0
  %765 = vmatpush1.msra.mxu0 0.0
  %766 = vmatprep.subr.mxu0 0.0
  %767 = vmatpush1.msra.mxu0 0.0
  %768 = vmatprep.subr.mxu0 0.0
  %769 = vmatpush1.msra.mxu0 0.0
  %770 = vmatprep.subr.mxu0 0.0
  %771 = vmatpush1.msra.mxu0 0.0
  %772 = vmatprep.mubr.f32.mxu0 0.0
  %773 = vmatmul.mubr.f32.gmra.mrb[0].mxu0 %v661
  %v774 = vpop.f32.mrb[0].mxu0
  %v775 = vadd.f32 0.0, %v774
  %v776 = vpop.f32.mrb[0].mxu0
  %777 = vmatprep.mubr.f32.mxu0 0.0
  %778 = vmatmul.mubr.f32.gmra.mrb[0].mxu0 %v664
  %v779 = vpop.f32.mrb[0].mxu0
  %v780 = vadd.f32 0.0, %v779
  %v781 = vpop.f32.mrb[0].mxu0
  %782 = vmatprep.mubr.f32.mxu0 0.0
  %783 = vmatmul.mubr.f32.gmra.mrb[0].mxu0 %v667
  %v784 = vpop.f32.mrb[0].mxu0
  %v785 = vadd.f32 0.0, %v784
  %v786 = vpop.f32.mrb[0].mxu0
  %787 = vmatprep.mubr.f32.mxu0 0.0
  %788 = vmatmul.mubr.f32.gmra.mrb[0].mxu0 %v670
  %v789 = vpop.f32.mrb[0].mxu0
  %v790 = vadd.f32 0.0, %v789
  %v791 = vpop.f32.mrb[0].mxu0
  %792 = vmatprep.mubr.f32.mxu0 0.0
  %793 = vmatmul.mubr.f32.gmra.mrb[0].mxu0 %v673
  %v794 = vpop.f32.mrb[0].mxu0
  %v795 = vadd.f32 0.0, %v794
  %v796 = vpop.f32.mrb[0].mxu0
  %797 = vmatprep.mubr.f32.mxu0 0.0
  %798 = vmatmul.mubr.f32.gmra.mrb[0].mxu0 %v676
  %v799 = vpop.f32.mrb[0].mxu0
  %v800 = vadd.f32 0.0, %v799
  %v801 = vpop.f32.mrb[0].mxu0
  %802 = vmatprep.mubr.f32.mxu0 0.0
  %803 = vmatmul.mubr.f32.gmra.mrb[0].mxu0 %v679
  %v804 = vpop.f32.mrb[0].mxu0
  %v805 = vadd.f32 0.0, %v804
  %v806 = vpop.f32.mrb[0].mxu0
  %807 = vmatprep.mubr.f32.mxu0 0.0
  %808 = vmatmul.mubr.f32.gmra.mrb[0].mxu0 %v682
  %v809 = vpop.f32.mrb[0].mxu0
  %v810 = vadd.f32 0.0, %v809
  %v811 = vpop.f32.mrb[0].mxu0
  %812 = vmatprep.mubr.f32.mxu0 0.0
  %813 = vmatmul.mubr.f32.gmra.mrb[0].mxu0 %v685
  %v814 = vpop.f32.mrb[0].mxu0
  %v815 = vadd.f32 0.0, %v814
  %v816 = vpop.f32.mrb[0].mxu0
  %817 = vmatprep.mubr.f32.mxu0 0.0
  %818 = vmatmul.mubr.f32.gmra.mrb[0].mxu0 %v688
  %v819 = vpop.f32.mrb[0].mxu0
  %v820 = vadd.f32 0.0, %v819
  %v821 = vpop.f32.mrb[0].mxu0
  %822 = vmatprep.mubr.f32.mxu0 0.0
  %823 = vmatmul.mubr.f32.gmra.mrb[0].mxu0 %v691
  %v824 = vpop.f32.mrb[0].mxu0
  %v825 = vadd.f32 0.0, %v824
  %v826 = vpop.f32.mrb[0].mxu0
  %827 = vmatprep.mubr.f32.mxu0 0.0
  %828 = vmatmul.mubr.f32.gmra.mrb[0].mxu0 %v694
  %v829 = vpop.f32.mrb[0].mxu0
  %v830 = vadd.f32 0.0, %v829
  %v831 = vpop.f32.mrb[0].mxu0
  %832 = vmatprep.mubr.f32.mxu0 0.0
  %833 = vmatmul.mubr.f32.gmra.mrb[0].mxu0 %v697
  %v834 = vpop.f32.mrb[0].mxu0
  %v835 = vadd.f32 0.0, %v834
  %v836 = vpop.f32.mrb[0].mxu0
  %837 = vmatprep.mubr.f32.mxu0 0.0
  %838 = vmatmul.mubr.f32.gmra.mrb[0].mxu0 %v700
  %v839 = vpop.f32.mrb[0].mxu0
  %v840 = vadd.f32 0.0, %v839
  %v841 = vpop.f32.mrb[0].mxu0
  %842 = vmatprep.mubr.f32.mxu0 0.0
  %843 = vmatmul.mubr.f32.gmra.mrb[0].mxu0 %v703
  %v844 = vpop.f32.mrb[0].mxu0
  %v845 = vadd.f32 0.0, %v844
  %v846 = vpop.f32.mrb[0].mxu0
  %847 = vmatprep.mubr.f32.mxu0 0.0
  %848 = vmatmul.mubr.f32.gmra.mrb[0].mxu0 %v706
  %v849 = vpop.f32.mrb[0].mxu0
  %v850 = vadd.f32 0.0, %v849
  %v851 = vpop.f32.mrb[0].mxu0
  %852 = vdwg.mxu0
  %v853 = vmul.f32 %v775, %v90
  %v854 = vmul.f32 %v780, %v91
  %v855 = vmul.f32 %v785, %v92
  %v856 = vmul.f32 %v790, %v93
  %v857 = vmul.f32 %v795, %v94
  %v858 = vmul.f32 %v800, %v95
  %v859 = vmul.f32 %v805, %v96
  %v860 = vmul.f32 %v810, %v97
  %v861 = vmul.f32 %v815, %v98
  %v862 = vmul.f32 %v820, %v99
  %v863 = vmul.f32 %v825, %v100
  %v864 = vmul.f32 %v830, %v101
  %v865 = vmul.f32 %v835, %v102
  %v866 = vmul.f32 %v840, %v103
  %v867 = vmul.f32 %v845, %v104
  %v868 = vmul.f32 %v850, %v105
  %v869 = vpack.c.bf16 %v854, %v853
  %v870 = vpack.c.bf16 %v856, %v855
  %v871 = vpack.c.bf16 %v858, %v857
  %v872 = vpack.c.bf16 %v860, %v859
  %v873 = vpack.c.bf16 %v862, %v861
  %v874 = vpack.c.bf16 %v864, %v863
  %v875 = vpack.c.bf16 %v866, %v865
  %v876 = vpack.c.bf16 %v868, %v867
  %v877 = vpack.c.bf16 %v659, %v658
  %v878 = vld [vmem:[%s4] sm:$0x1]
  %v880 = vlaneseq
  %v881 = vshrl.u32 %v880, 7
  %v882 = vsub.s32 0, %v881
  %v883 = vrot.slane %v878, %v882
  %885 = vmatprep.subr.bf16.mxu0 0
  %886 = vmatpush1.bf16.msra.mxu0 %v869
  %887 = vmatprep.subr.bf16.mxu0 0
  %888 = vmatpush1.bf16.msra.mxu0 %v870
  %889 = vmatprep.subr.bf16.mxu0 0
  %890 = vmatpush1.bf16.msra.mxu0 %v871
  %891 = vmatprep.subr.bf16.mxu0 0
  %892 = vmatpush1.bf16.msra.mxu0 %v872
  %893 = vmatprep.subr.bf16.mxu0 0
  %894 = vmatpush1.bf16.msra.mxu0 %v873
  %895 = vmatprep.subr.bf16.mxu0 0
  %896 = vmatpush1.bf16.msra.mxu0 %v874
  %897 = vmatprep.subr.bf16.mxu0 0
  %898 = vmatpush1.bf16.msra.mxu0 %v875
  %899 = vmatprep.subr.bf16.mxu0 0
  %900 = vmatpush1.bf16.msra.mxu0 %v876
  %901 = vmatprep.subr.bf16.mxu0 0
  %902 = vmatpush1.bf16.msra.mxu0 0
  %903 = vmatprep.subr.bf16.mxu0 0
  %904 = vmatpush1.bf16.msra.mxu0 0
  %905 = vmatprep.subr.bf16.mxu0 0
  %906 = vmatpush1.bf16.msra.mxu0 0
  %907 = vmatprep.subr.bf16.mxu0 0
  %908 = vmatpush1.bf16.msra.mxu0 0
  %909 = vmatprep.subr.bf16.mxu0 0
  %910 = vmatpush1.bf16.msra.mxu0 0
  %911 = vmatprep.subr.bf16.mxu0 0
  %912 = vmatpush1.bf16.msra.mxu0 0
  %913 = vmatprep.subr.bf16.mxu0 0
  %914 = vmatpush1.bf16.msra.mxu0 0
  %915 = vmatprep.subr.bf16.mxu0 0
  %916 = vmatpush1.bf16.msra.mxu0 0
  %917 = vmatprep.mubr.bf16.mxu0 0
  %918 = vmatmul.mubr.bf16.gmra.mrb[0].mxu0 %v877
  %v919 = vpop.f32.mrb[0].mxu0
  %v920 = vadd.f32 %v883, %v919
  %v921 = vpop.f32.mrb[0].mxu0
  %v922 = vpop.f32.mrb[0].mxu0
  %v923 = vadd.f32 %v883, %v922
  %v924 = vpop.f32.mrb[0].mxu0
  %925 = vdwg.mxu0
  %v926 = vmax.f32 %v920, 0.0
  %v927 = vmax.f32 %v923, 0.0
  %v928 = vpack.c.bf16 %v927, %v926
  %v929 = vld [vmem:[%s5] sm:$0xf]
  %v930 = vld [vmem:[%s5 + $0x4] sm:$0xf]
  %v931 = vld [vmem:[%s5 + $0x8] sm:$0xf]
  %v932 = vld [vmem:[%s5 + $0xc] sm:$0xf]
  %v933 = vld [vmem:[%s5 + $0x10] sm:$0xf]
  %v934 = vld [vmem:[%s5 + $0x14] sm:$0xf]
  %v935 = vld [vmem:[%s5 + $0x18] sm:$0xf]
  %v936 = vld [vmem:[%s5 + $0x1c] sm:$0xf]
  %v945 = vunpack.c.l.b16 %v929
  %v946 = vunpack.c.l.b16 %v930
  %v947 = vunpack.c.l.b16 %v931
  %v948 = vunpack.c.l.b16 %v932
  %v949 = vunpack.c.l.b16 %v933
  %v950 = vunpack.c.l.b16 %v934
  %v951 = vunpack.c.l.b16 %v935
  %v952 = vunpack.c.l.b16 %v936
  %v953 = vpack.c.b16 %v946, %v945
  %v954 = vpack.c.b16 %v948, %v947
  %v955 = vpack.c.b16 %v950, %v949
  %v956 = vpack.c.b16 %v952, %v951
  %v962 = vsel %vm163, %v928, 0
  %964 = vmatprep.subr.bf16.mxu0 0
  %965 = vmatpush1.bf16.msra.mxu0 %v953
  %966 = vmatprep.subr.bf16.mxu0 0
  %967 = vmatpush1.bf16.msra.mxu0 %v954
  %968 = vmatprep.subr.bf16.mxu0 0
  %969 = vmatpush1.bf16.msra.mxu0 %v955
  %970 = vmatprep.subr.bf16.mxu0 0
  %971 = vmatpush1.bf16.msra.mxu0 %v956
  %972 = vmatprep.subr.bf16.mxu0 0
  %973 = vmatpush1.bf16.msra.mxu0 0
  %974 = vmatprep.subr.bf16.mxu0 0
  %975 = vmatpush1.bf16.msra.mxu0 0
  %976 = vmatprep.subr.bf16.mxu0 0
  %977 = vmatpush1.bf16.msra.mxu0 0
  %978 = vmatprep.subr.bf16.mxu0 0
  %979 = vmatpush1.bf16.msra.mxu0 0
  %980 = vmatprep.subr.bf16.mxu0 0
  %981 = vmatpush1.bf16.msra.mxu0 0
  %982 = vmatprep.subr.bf16.mxu0 0
  %983 = vmatpush1.bf16.msra.mxu0 0
  %984 = vmatprep.subr.bf16.mxu0 0
  %985 = vmatpush1.bf16.msra.mxu0 0
  %986 = vmatprep.subr.bf16.mxu0 0
  %987 = vmatpush1.bf16.msra.mxu0 0
  %988 = vmatprep.subr.bf16.mxu0 0
  %989 = vmatpush1.bf16.msra.mxu0 0
  %990 = vmatprep.subr.bf16.mxu0 0
  %991 = vmatpush1.bf16.msra.mxu0 0
  %992 = vmatprep.subr.bf16.mxu0 0
  %993 = vmatpush1.bf16.msra.mxu0 0
  %994 = vmatprep.subr.bf16.mxu0 0
  %995 = vmatpush1.bf16.msra.mxu0 0
  %996 = vmatprep.mubr.bf16.mxu0 0
  %997 = vmatmul.mubr.bf16.gmra.mrb[0].mxu0 %v962
  %v998 = vpop.f32.mrb[0].mxu0
  %v999 = vadd.f32 0.0, %v998
  %v1000 = vpop.f32.mrb[0].mxu0
  %v1001 = vpop.f32.mrb[0].mxu0
  %v1002 = vadd.f32 0.0, %v1001
  %v1003 = vpop.f32.mrb[0].mxu0
  %1004 = vdwg.mxu0
  %v1005 = vld [vmem:[%s7] sm:$0x1]
  %v1007 = vlaneseq
  %v1008 = vshrl.u32 %v1007, 7
  %v1009 = vsub.s32 0, %v1008
  %v1010 = vrot.slane %v1005, %v1009
  %v1012 = vmul.f32 %v999, %v1010
  %v1013 = vmul.f32 %v1002, %v1010
  %vm1014 = vcmask 31744
  %v1015 = vsel %vm1014, %v1012, 0.0
  %1016 = vadd.xlane.f32.xlu0 %v1015
  %v1017 = vpop.xlane.xlu0 %1016
  %v1018 = vsel %vm1014, %v1013, 0.0
  %1019 = vadd.xlane.f32.xlu0 %v1018
  %v1020 = vpop.xlane.xlu0 %1019
  %v1021 = vld [vmem:[%s6] sm:$0x1]
  %v1023 = vsel %vm1014, %v1021, 0
  %v1026 = vsel %vm1014, %v999, 0
  %v1029 = vsel %vm1014, %v1002, 0
  %1031 = vmatprep.subr.mxu0 0.0
  %1032 = vmatpush1.xpose.msra.mxu0 %v1026
  %1033 = vmatprep.subr.mxu0 0.0
  %1034 = vmatpush1.xpose.msra.mxu0 %v1029
  %1035 = vmatprep.subr.mxu0 0.0
  %1036 = vmatpush1.xpose.msra.mxu0 0.0
  %1037 = vmatprep.subr.mxu0 0.0
  %1038 = vmatpush1.xpose.msra.mxu0 0.0
  %1039 = vmatprep.subr.mxu0 0.0
  %1040 = vmatpush1.xpose.msra.mxu0 0.0
  %1041 = vmatprep.subr.mxu0 0.0
  %1042 = vmatpush1.xpose.msra.mxu0 0.0
  %1043 = vmatprep.subr.mxu0 0.0
  %1044 = vmatpush1.xpose.msra.mxu0 0.0
  %1045 = vmatprep.subr.mxu0 0.0
  %1046 = vmatpush1.xpose.msra.mxu0 0.0
  %1047 = vmatprep.subr.mxu0 0.0
  %1048 = vmatpush1.xpose.msra.mxu0 0.0
  %1049 = vmatprep.subr.mxu0 0.0
  %1050 = vmatpush1.xpose.msra.mxu0 0.0
  %1051 = vmatprep.subr.mxu0 0.0
  %1052 = vmatpush1.xpose.msra.mxu0 0.0
  %1053 = vmatprep.subr.mxu0 0.0
  %1054 = vmatpush1.xpose.msra.mxu0 0.0
  %1055 = vmatprep.subr.mxu0 0.0
  %1056 = vmatpush1.xpose.msra.mxu0 0.0
  %1057 = vmatprep.subr.mxu0 0.0
  %1058 = vmatpush1.xpose.msra.mxu0 0.0
  %1059 = vmatprep.subr.mxu0 0.0
  %1060 = vmatpush1.xpose.msra.mxu0 0.0
  %1061 = vmatprep.subr.mxu0 0.0
  %1062 = vmatpush1.xpose.msra.mxu0 0.0
  %1063 = vmatprep.subr.mxu0 0.0
  %1064 = vmatpush1.xpose.msra.mxu0 0.0
  %1065 = vmatprep.subr.mxu0 0.0
  %1066 = vmatpush1.xpose.msra.mxu0 0.0
  %1067 = vmatprep.subr.mxu0 0.0
  %1068 = vmatpush1.xpose.msra.mxu0 0.0
  %1069 = vmatprep.subr.mxu0 0.0
  %1070 = vmatpush1.xpose.msra.mxu0 0.0
  %1071 = vmatprep.subr.mxu0 0.0
  %1072 = vmatpush1.xpose.msra.mxu0 0.0
  %1073 = vmatprep.subr.mxu0 0.0
  %1074 = vmatpush1.xpose.msra.mxu0 0.0
  %1075 = vmatprep.subr.mxu0 0.0
  %1076 = vmatpush1.xpose.msra.mxu0 0.0
  %1077 = vmatprep.subr.mxu0 0.0
  %1078 = vmatpush1.xpose.msra.mxu0 0.0
  %1079 = vmatprep.subr.mxu0 0.0
  %1080 = vmatpush1.xpose.msra.mxu0 0.0
  %1081 = vmatprep.subr.mxu0 0.0
  %1082 = vmatpush1.xpose.msra.mxu0 0.0
  %1083 = vmatprep.subr.mxu0 0.0
  %1084 = vmatpush1.xpose.msra.mxu0 0.0
  %1085 = vmatprep.subr.mxu0 0.0
  %1086 = vmatpush1.xpose.msra.mxu0 0.0
  %1087 = vmatprep.subr.mxu0 0.0
  %1088 = vmatpush1.xpose.msra.mxu0 0.0
  %1089 = vmatprep.subr.mxu0 0.0
  %1090 = vmatpush1.xpose.msra.mxu0 0.0
  %1091 = vmatprep.subr.mxu0 0.0
  %1092 = vmatpush1.xpose.msra.mxu0 0.0
  %1093 = vmatprep.subr.mxu0 0.0
  %1094 = vmatpush1.xpose.msra.mxu0 0.0
  %1095 = vmatprep.mubr.f32.mxu0 0.0
  %1096 = vmatmul.mubr.f32.gmra.mrb[0].mxu0 %v1023
  %v1097 = vpop.f32.mrb[0].mxu0
  %v1098 = vadd.f32 0.0, %v1097
  %v1099 = vpop.f32.mrb[0].mxu0
  %1100 = vdwg.mxu0
  %v1101 = vlaneseq
  %v1102 = vshrl.u32 %v1101, 7
  %v1103 = vsub.s32 0, %v1102
  %v1104 = vrot.slane %v1098, %v1103
  %v1105 = vadd.f32 %v1017, %v1104
  %v1106 = vadd.f32 %v1020, %v1104
  %v1107 = vmul.f32 %v1105, 0.2
  %v1108 = vmul.f32 %v1106, 0.2
  %v1109 = vmax.f32 %v1105, %v1107
  %v1110 = vmax.f32 %v1106, %v1108
  %v1111 = vadd.f32 %v1109, %v53
  %v1112 = vadd.f32 %v1110, %v54
  %v1113 = vsel %vm117, %v1111, -inf
  %1114 = vmax.xlane.f32.xlu0 %v1113
  %v1115 = vpop.xlane.xlu0 %1114
  %v1116 = vsel %vm117, %v1112, -inf
  %1117 = vmax.xlane.f32.xlu0 %v1116
  %v1118 = vpop.xlane.xlu0 %1117
  %v1119 = vsub.f32 %v1111, %v1115
  %v1120 = vsub.f32 %v1112, %v1118
  %v1121 = vmul.f32 %v1119, 1.442695
  %v1122 = vpow.pop %v1121
  %v1123 = vmul.f32 %v1120, 1.442695
  %v1124 = vpow.pop %v1123
  %v1125 = vsel %vm117, %v1122, 0.0
  %1126 = vadd.xlane.f32.xlu0 %v1125
  %v1127 = vpop.xlane.xlu0 %1126
  %v1128 = vsel %vm117, %v1124, 0.0
  %1129 = vadd.xlane.f32.xlu0 %v1128
  %v1130 = vpop.xlane.xlu0 %1129
  %v1131 = vrcp.pop %v1127
  %v1132 = vrcp.pop %v1130
  %v1133 = vmul.f32 %v1122, %v1131
  %v1134 = vmul.f32 %v1124, %v1132
  %v1135 = vpack.c.bf16 %v1134, %v1133
  %v1136 = vpack.c.bf16 %v1002, %v999
  %v1137 = vld [vmem:[%s8] sm:$0x1]
  %v1139 = vlaneseq
  %v1140 = vshrl.u32 %v1139, 7
  %v1141 = vsub.s32 0, %v1140
  %v1142 = vrot.slane %v1137, %v1141
  %v1145 = vsel %vm117, %v1135, 0
  %1147 = vmatprep.subr.bf16.mxu0 0
  %1148 = vmatpush1.bf16.msra.mxu0 %v1136
  %1149 = vmatprep.subr.bf16.mxu0 0
  %1150 = vmatpush1.bf16.msra.mxu0 0
  %1151 = vmatprep.subr.bf16.mxu0 0
  %1152 = vmatpush1.bf16.msra.mxu0 0
  %1153 = vmatprep.subr.bf16.mxu0 0
  %1154 = vmatpush1.bf16.msra.mxu0 0
  %1155 = vmatprep.subr.bf16.mxu0 0
  %1156 = vmatpush1.bf16.msra.mxu0 0
  %1157 = vmatprep.subr.bf16.mxu0 0
  %1158 = vmatpush1.bf16.msra.mxu0 0
  %1159 = vmatprep.subr.bf16.mxu0 0
  %1160 = vmatpush1.bf16.msra.mxu0 0
  %1161 = vmatprep.subr.bf16.mxu0 0
  %1162 = vmatpush1.bf16.msra.mxu0 0
  %1163 = vmatprep.subr.bf16.mxu0 0
  %1164 = vmatpush1.bf16.msra.mxu0 0
  %1165 = vmatprep.subr.bf16.mxu0 0
  %1166 = vmatpush1.bf16.msra.mxu0 0
  %1167 = vmatprep.subr.bf16.mxu0 0
  %1168 = vmatpush1.bf16.msra.mxu0 0
  %1169 = vmatprep.subr.bf16.mxu0 0
  %1170 = vmatpush1.bf16.msra.mxu0 0
  %1171 = vmatprep.subr.bf16.mxu0 0
  %1172 = vmatpush1.bf16.msra.mxu0 0
  %1173 = vmatprep.subr.bf16.mxu0 0
  %1174 = vmatpush1.bf16.msra.mxu0 0
  %1175 = vmatprep.subr.bf16.mxu0 0
  %1176 = vmatpush1.bf16.msra.mxu0 0
  %1177 = vmatprep.subr.bf16.mxu0 0
  %1178 = vmatpush1.bf16.msra.mxu0 0
  %1179 = vmatprep.mubr.bf16.mxu0 0
  %1180 = vmatmul.mubr.bf16.gmra.mrb[0].mxu0 %v1145
  %v1181 = vpop.f32.mrb[0].mxu0
  %v1182 = vadd.f32 %v1142, %v1181
  %v1183 = vpop.f32.mrb[0].mxu0
  %v1184 = vpop.f32.mrb[0].mxu0
  %v1185 = vadd.f32 %v1142, %v1184
  %v1186 = vpop.f32.mrb[0].mxu0
  %1187 = vdwg.mxu0
  %v1188 = vsel %vm1014, %v1182, -inf
  %1189 = vmax.xlane.f32.xlu0 %v1188
  %v1190 = vpop.xlane.xlu0 %1189
  %v1191 = vsel %vm1014, %v1185, -inf
  %1192 = vmax.xlane.f32.xlu0 %v1191
  %v1193 = vpop.xlane.xlu0 %1192
  %v1194 = vsub.f32 %v1182, %v1190
  %v1195 = vsub.f32 %v1185, %v1193
  %v1196 = vmul.f32 %v1194, 1.442695
  %v1197 = vpow.pop %v1196
  %v1198 = vmul.f32 %v1195, 1.442695
  %v1199 = vpow.pop %v1198
  %v1200 = vsel %vm1014, %v1197, 0.0
  %1201 = vadd.xlane.f32.xlu0 %v1200
  %v1202 = vpop.xlane.xlu0 %1201
  %v1203 = vsel %vm1014, %v1199, 0.0
  %1204 = vadd.xlane.f32.xlu0 %v1203
  %v1205 = vpop.xlane.xlu0 %1204
  %v1206 = vlog2.pop %v1202
  %v1207 = vmul.f32 %v1206, 0.6931472
  %v1208 = vlog2.pop %v1205
  %v1209 = vmul.f32 %v1208, 0.6931472
  %v1210 = vsub.f32 %v1194, %v1207
  %v1211 = vsub.f32 %v1195, %v1209
  %1212 = vst.msk [vmem:[%s15] sm:$0xff] %vm1014, %v1210
  %1213 = vst.msk [vmem:[%s15 + $0x8] sm:$0xff] %vm1014, %v1211
  // Predicated region
  $region62: #{tpu_custom_call.1} parent=0 // pred_check
    _
  $region63: #{tpu_custom_call.1} parent=0 // pred_check_branch
    %1215 = sbr.rel (0) target = $region65
  $region64: #{tpu_custom_call.1} parent=0 // pred_region
    _
  $region65: #{tpu_custom_call.1} parent=0 // pred_fallthru
    _
  // Predicated region
  $region66: #{tpu_custom_call.1} parent=0 // pred_check
    _
  $region67: #{tpu_custom_call.1} parent=0 // pred_check_branch
    %1217 = sbr.rel (0) target = $region69
  $region68: #{tpu_custom_call.1} parent=0 // pred_region
    _
  $region69: #{tpu_custom_call.1} parent=0 // pred_fallthru
    _

</llo_original>
